<compile_context>
chip_gen: v7x
topology: tpu7x:2x2x1
jax: 0.10.0
libtpu: 0.0.40
codegen_flags: <defaults>
</compile_context>

<pallas_src>
import functools
import math

import jax
import jax.numpy as jnp
from jax.experimental import pallas as pl
from jax.experimental.pallas import tpu as pltpu

# ----------------------- config (args of Sup_MCL_Loss) -----------------------
NUMBER_NET = 2
REP_DIM = 64          # = 4*4*4 after flattening the (B, 4, 4, 4) inputs
FEAT_DIM = 32
N_DATA = 100
N_PAD = 128           # memory-bank rows zero-padded to a full 128-row block per network
POS_K = 2
NEG_K = 5
K_ALL = POS_K + NEG_K + 1   # 8
KD_T = 4.0
TAU = 0.07
NCE_M = 0.5
BATCH = 4
EPS = 1e-12

assert N_DATA <= N_PAD, "one-hot lane select requires n_data <= 128 per bank block"

_VMEM = pl.BlockSpec(memory_space=pltpu.MemorySpace.VMEM)


# ------------------------------ fused Pallas kernel ------------------------------
def _fused_kernel(idx_ref, anc_ref, x_ref, w1_ref, b1_ref, w2_ref, b2_ref, bank_ref,
                  loss_ref, emb_ref, newbank_ref):
    B = idx_ref.shape[0]
    TWO_B = NUMBER_NET * B
    inv_tau = 1.0 / TAU
    inv_T = 1.0 / KD_T
    f32 = jnp.float32

    # ---- 1. both projection heads in ONE matmul pair (block-diagonal packed weights) ----
    x = x_ref[...]                                                          # (B, 2*REP) = [x0 | x1]
    h = jnp.maximum(jnp.dot(x, w1_ref[...], preferred_element_type=f32) + b1_ref[...], 0.0)
    y = jnp.dot(h, w2_ref[...], preferred_element_type=f32) + b2_ref[...]   # (B, 2*FEAT) = [y0 | y1]
    ysq = y * y
    inv0 = jax.lax.rsqrt(jnp.sum(ysq[:, :FEAT_DIM], axis=1, keepdims=True) + EPS)
    inv1 = jax.lax.rsqrt(jnp.sum(ysq[:, FEAT_DIM:], axis=1, keepdims=True) + EPS)
    half = jax.lax.broadcasted_iota(jnp.int32, (B, NUMBER_NET * FEAT_DIM), 1) < FEAT_DIM
    emb_cat = y * jnp.where(half, inv0, inv1)                               # (B, 64) L2-normed halves
    emb_ref[...] = emb_cat

    # stack the two networks along sublanes -> full 8-sublane vregs for everything below
    emb = jnp.concatenate([emb_cat[:, :FEAT_DIM], emb_cat[:, FEAT_DIM:]], axis=0)   # (2B, FEAT)

    # ---- 2. ONE fused cosine matmul against both zero-padded banks (A @ B^T, NT form) ----
    bank = bank_ref[...]                                                    # (2*N_PAD, FEAT)
    cos_all = jax.lax.dot_general(emb * inv_tau, bank,
                                  (((1,), (1,)), ((), ())),
                                  preferred_element_type=f32)               # (2B, 2*N_PAD)
    # rows: j*B + b (embedding of net j) ; cols: i*N_PAD + n (memory bank of net i)

    # stack the four (bank i, emb j) blocks along sublanes:
    #   rows 0:B    -> (0,0) intra net0       rows B:2B   -> (1,1) intra net1
    #   rows 2B:3B  -> (0,1) cos_simi_ij      rows 3B:4B  -> (1,0) cos_simi_ji
    cos_stack = jnp.concatenate(
        [cos_all[0:B, 0:N_PAD], cos_all[B:TWO_B, N_PAD:],
         cos_all[B:TWO_B, 0:N_PAD], cos_all[0:B, N_PAD:]], axis=0)          # (4B, N_PAD)

    # ---- 3. one shared one-hot column select (replaces four gathers) ----
    idx = idx_ref[...]                                                      # (B, K_ALL) int32
    idx4 = jnp.concatenate([idx, idx, idx, idx], axis=0)                    # (4B, K_ALL)
    lane_n = jax.lax.broadcasted_iota(jnp.int32, (NUMBER_NET * TWO_B, K_ALL, N_PAD), 2)
    onehot = (lane_n == idx4[:, :, None]).astype(f32)                       # (4B, K_ALL, N_PAD)
    sel = jnp.sum(onehot * cos_stack[:, None, :], axis=-1)                  # (4B, K_ALL)

    intra = sel[0:TWO_B, 1:]        # (2B, K_ALL-1)  anchor column dropped (idx[:, 1:])
    inter = sel[TWO_B:, :]          # (2B, K_ALL)    rows 0:B = cos_ij, B:2B = cos_ji

    # ---- 4. losses: one log-softmax + one full reduce per bucket ----
    def log_softmax(z):
        m = jnp.max(z, axis=1, keepdims=True)
        z = z - m
        return z - jnp.log(jnp.sum(jnp.exp(z), axis=1, keepdims=True))

    def sym_kl(stack):
        # kl(a||teacher b) + kl(b||teacher a) == sum((pb - pa) * (log pb - log pa))
        lt = log_softmax(stack * inv_T)
        pt = jnp.exp(lt)
        return jnp.sum((pt[B:] - pt[:B]) * (lt[B:] - lt[:B])) * (KD_T * KD_T / B)

    col = jax.lax.broadcasted_iota(jnp.int32, (TWO_B, K_ALL), 1)
    mask_icl = (col < POS_K + 1).astype(f32)        # (2B, K_ALL)
    mask_vcl = mask_icl[:, 1:]                      # (2B, K_ALL-1): first POS_K intra columns

    def supcon(stack, mask, n_pos):
        return -jnp.sum(mask * log_softmax(stack)) / (n_pos * B)

    vcl = supcon(intra, mask_vcl, POS_K)
    icl = supcon(inter, mask_icl, POS_K + 1)
    soft_vcl = sym_kl(intra)
    soft_icl = sym_kl(inter)

    lane4 = jax.lax.broadcasted_iota(jnp.int32, (1, 4), 1)
    loss_ref[...] = (jnp.where(lane4 == 0, vcl, 0.0) + jnp.where(lane4 == 1, soft_vcl, 0.0)
                     + jnp.where(lane4 == 2, icl, 0.0) + jnp.where(lane4 == 3, soft_icl, 0.0))

    # ---- 5. in-kernel no-grad momentum memory update (output aliased to the bank input) ----
    # TODO(synk): with repeated anchor indices this sums colliding rows instead of PyTorch
    # index_copy_'s last-write-wins; identical whenever the per-batch anchors are unique.
    anc = anc_ref[...]                                                      # (1, B) anchors (row)
    tgt_row = jnp.concatenate([anc, anc + N_PAD], axis=1)                   # (1, 2B) target rows
    tgt_col = jnp.concatenate([idx[:, 0:1], idx[:, 0:1] + N_PAD], axis=0)   # (2B, 1) same, column
    lane_c = jax.lax.broadcasted_iota(jnp.int32, (TWO_B, NUMBER_NET * N_PAD), 1)
    onehot_g = (lane_c == tgt_col).astype(f32)                              # (2B, 2*N_PAD) gather
    row_i = jax.lax.broadcasted_iota(jnp.int32, (NUMBER_NET * N_PAD, TWO_B), 0)
    onehot_s = (row_i == tgt_row).astype(f32)                               # (2*N_PAD, 2B) scatter

    old_pos = jnp.dot(onehot_g, bank, preferred_element_type=f32)           # (2B, FEAT)
    mixed = old_pos * NCE_M + emb * (1.0 - NCE_M)
    mixed = mixed * jax.lax.rsqrt(jnp.sum(mixed * mixed, axis=1, keepdims=True) + EPS)
    scattered = jnp.dot(onehot_s, mixed, preferred_element_type=f32)        # (2*N_PAD, FEAT)
    updated = jnp.sum(onehot_s, axis=1, keepdims=True) > 0.5                # (2*N_PAD, 1)
    newbank_ref[...] = jnp.where(updated, scattered, bank)


# ----------------------- one-time packing helpers (NOT per step) -----------------------
def prepare_params(params):
    """Pack the two projection heads into block-diagonal weights (done once)."""
    (w1a, b1a, w2a, b2a), (w1b, b1b, w2b, b2b) = params
    zr = jnp.zeros((REP_DIM, FEAT_DIM), jnp.float32)
    zf = jnp.zeros((FEAT_DIM, FEAT_DIM), jnp.float32)
    w1_bd = jnp.block([[w1a, zr], [zr, w1b]])                 # (2*REP, 2*FEAT)
    w2_bd = jnp.block([[w2a, zf], [zf, w2b]])                 # (2*FEAT, 2*FEAT)
    b1_cat = jnp.concatenate([b1a, b1b], axis=1)              # (1, 2*FEAT)
    b2_cat = jnp.concatenate([b2a, b2b], axis=1)              # (1, 2*FEAT)
    return w1_bd, b1_cat, w2_bd, b2_cat


def prepare_memory(memories):
    """Persistent bank layout: both banks zero-padded to 128 rows, concatenated -> (256, 32)."""
    return jnp.concatenate(
        [jnp.pad(m, ((0, N_PAD - N_DATA), (0, 0))) for m in memories], axis=0)


def unpack_memory(bank_all):
    return [bank_all[i * N_PAD:i * N_PAD + N_DATA] for i in range(NUMBER_NET)]


# --------------------------------- per-step forward -----------------------------------
@functools.partial(jax.jit, donate_argnums=(4,))
def sup_mcl_step(embeddings, pos_idx, neg_idx, packed_params, bank_all):
    B = embeddings[0].shape[0]
    w1_bd, b1_cat, w2_bd, b2_cat = packed_params
    x_cat = jnp.concatenate([e.reshape(B, -1).astype(jnp.float32) for e in embeddings], axis=1)
    idx = jnp.concatenate([pos_idx, neg_idx], axis=1).astype(jnp.int32)     # (B, K_ALL)
    anchor_row = pos_idx[:, 0].astype(jnp.int32).reshape(1, B)              # (1, B)

    losses, emb_cat, new_bank = pl.pallas_call(
        _fused_kernel,
        out_shape=(jax.ShapeDtypeStruct((1, 4), jnp.float32),
                   jax.ShapeDtypeStruct((B, NUMBER_NET * FEAT_DIM), jnp.float32),
                   jax.ShapeDtypeStruct((NUMBER_NET * N_PAD, FEAT_DIM), jnp.float32)),
        in_specs=[_VMEM] * 8,
        out_specs=(_VMEM, _VMEM, _VMEM),
        input_output_aliases={7: 2},   # bank input -> updated-bank output (in-place update)
    )(idx, anchor_row, x_cat, w1_bd, b1_cat, w2_bd, b2_cat, bank_all)
    return losses, emb_cat, new_bank


# ----------------------------- pure-JAX reference -----------------------------
def _ref_kl(y_s, y_t, T):
    log_ps = jax.nn.log_softmax(y_s / T, axis=1)
    log_pt = jax.nn.log_softmax(y_t / T, axis=1)
    pt = jnp.exp(log_pt)
    return jnp.sum(pt * (log_pt - log_ps)) / y_s.shape[0] * T * T


def _ref_supcon(logit, n_pos):
    log_prob = logit - jnp.log(jnp.sum(jnp.exp(logit), axis=1, keepdims=True))
    mask = (jnp.arange(logit.shape[1])[None, :] < n_pos).astype(jnp.float32)
    mean_log_prob_pos = jnp.sum(mask * log_prob, axis=1) / n_pos
    return -jnp.mean(mean_log_prob_pos)


def reference_forward(embeddings, pos_idx, neg_idx, params, memories):
    B = embeddings[0].shape[0]
    embs = []
    for i in range(NUMBER_NET):
        x = embeddings[i].reshape(B, -1).astype(jnp.float32)
        w1, b1, w2, b2 = params[i]
        y = jnp.maximum(x @ w1 + b1, 0.0) @ w2 + b2
        embs.append(y / jnp.sqrt(jnp.sum(y * y, axis=1, keepdims=True)))

    idx = jnp.concatenate([pos_idx, neg_idx], axis=1)
    K = POS_K + NEG_K + 1
    inter_logits, soft_icl = [], jnp.float32(0.0)
    for i in range(NUMBER_NET):
        for j in range(i + 1, NUMBER_NET):
            ri = jnp.take(memories[i], idx.reshape(-1), axis=0).reshape(B, K, FEAT_DIM)
            cij = jnp.einsum("bkd,bd->bk", ri, embs[j]) / TAU
            rj = jnp.take(memories[j], idx.reshape(-1), axis=0).reshape(B, K, FEAT_DIM)
            cji = jnp.einsum("bkd,bd->bk", rj, embs[i]) / TAU
            inter_logits += [cij, cji]
            soft_icl = soft_icl + _ref_kl(cij, cji, KD_T) + _ref_kl(cji, cij, KD_T)
    icl = sum(_ref_supcon(l, POS_K + 1) for l in inter_logits)

    idx2 = idx[:, 1:]
    K2 = POS_K + NEG_K
    intra = []
    for i in range(NUMBER_NET):
        r = jnp.take(memories[i], idx2.reshape(-1), axis=0).reshape(B, K2, FEAT_DIM)
        intra.append(jnp.einsum("bkd,bd->bk", r, embs[i]) / TAU)
    soft_vcl = jnp.float32(0.0)
    for i in range(NUMBER_NET):
        for j in range(NUMBER_NET):
            if i != j:
                soft_vcl = soft_vcl + _ref_kl(intra[i], intra[j], KD_T)
    vcl = sum(_ref_supcon(l, POS_K) for l in intra)
    return (vcl, soft_vcl, icl, soft_icl), embs


def reference_update(memories, embs, pos_idx):
    new = []
    sel = pos_idx[:, 0]
    for i in range(NUMBER_NET):
        pos = memories[i][sel] * NCE_M + embs[i] * (1.0 - NCE_M)
        pos = pos / jnp.sqrt(jnp.sum(pos * pos, axis=1, keepdims=True))
        new.append(memories[i].at[sel].set(pos))
    return new


# ----------------------------------- main -------------------------------------
if __name__ == "__main__":
    key = jax.random.PRNGKey(0)
    ks = jax.random.split(key, 4 * NUMBER_NET + NUMBER_NET + NUMBER_NET + 2)
    ki = iter(range(len(ks)))

    # Deterministic parameter init (PyTorch nn.Linear default: U(-1/sqrt(fan_in), 1/sqrt(fan_in)))
    params = []
    for i in range(NUMBER_NET):
        lim1 = 1.0 / math.sqrt(REP_DIM)
        lim2 = 1.0 / math.sqrt(FEAT_DIM)
        w1 = jax.random.uniform(ks[next(ki)], (REP_DIM, FEAT_DIM), jnp.float32, -lim1, lim1)
        b1 = jax.random.uniform(ks[next(ki)], (1, FEAT_DIM), jnp.float32, -lim1, lim1)
        w2 = jax.random.uniform(ks[next(ki)], (FEAT_DIM, FEAT_DIM), jnp.float32, -lim2, lim2)
        b2 = jax.random.uniform(ks[next(ki)], (1, FEAT_DIM), jnp.float32, -lim2, lim2)
        params.append((w1, b1, w2, b2))

    # Memory banks: rand(n_data, feat_dim) * 2*stdv - stdv
    stdv = 1.0 / math.sqrt(FEAT_DIM / 3)
    memories = [
        jax.random.uniform(ks[next(ki)], (N_DATA, FEAT_DIM), jnp.float32) * (2 * stdv) - stdv
        for _ in range(NUMBER_NET)
    ]

    # Inputs: NCHW feature maps (flattened to rep_dim inside the forward) and pos/neg indices.
    embeddings = tuple(
        jax.random.normal(ks[next(ki)], (BATCH, 4, 4, 4), jnp.float32)
        for _ in range(NUMBER_NET)
    )
    pos_rest = jax.random.randint(ks[next(ki)], (BATCH, POS_K), 0, N_DATA, jnp.int32)
    pos_idx = jnp.concatenate(
        [jnp.arange(BATCH, dtype=jnp.int32)[:, None], pos_rest], axis=1)     # (B, pos_k+1)
    neg_idx = jax.random.randint(ks[next(ki)], (BATCH, NEG_K), 0, N_DATA, jnp.int32)

    # One-time packing (kept across training steps); per-step call is a single pallas_call.
    packed_params = prepare_params(params)
    bank_all = prepare_memory(memories)

    losses, emb_cat, new_bank = sup_mcl_step(embeddings, pos_idx, neg_idx, packed_params, bank_all)
    jax.block_until_ready((losses, emb_cat, new_bank))
    vcl, soft_vcl, icl, soft_icl = losses[0, 0], losses[0, 1], losses[0, 2], losses[0, 3]

    # Verify against a pure-JAX reference of the PyTorch forward (losses + momentum bank update).
    (rvcl, rsoft_vcl, ricl, rsoft_icl), ref_embs = reference_forward(
        embeddings, pos_idx, neg_idx, params, memories)
    for a, b in [(vcl, rvcl), (soft_vcl, rsoft_vcl), (icl, ricl), (soft_icl, rsoft_icl)]:
        assert jnp.allclose(a, b, rtol=1e-3, atol=1e-3), (a, b)

    ref_new_mem = reference_update(memories, ref_embs, pos_idx)
    for a, b in zip(unpack_memory(new_bank), ref_new_mem):
        assert jnp.allclose(a, b, rtol=1e-3, atol=1e-3)

    print("KERNEL_OK")
</pallas_src>

<mosaic_0001>
module attributes {stable_mosaic.version = 11 : i64} {
  func.func @_fused_kernel(%arg0: memref<4x8xi32, #tpu.memory_space<vmem>>, %arg1: memref<1x4xi32, #tpu.memory_space<vmem>>, %arg2: memref<4x128xf32, #tpu.memory_space<vmem>>, %arg3: memref<128x64xf32, #tpu.memory_space<vmem>>, %arg4: memref<1x64xf32, #tpu.memory_space<vmem>>, %arg5: memref<64x64xf32, #tpu.memory_space<vmem>>, %arg6: memref<1x64xf32, #tpu.memory_space<vmem>>, %arg7: memref<256x32xf32, #tpu.memory_space<vmem>>, %arg8: memref<1x4xf32, #tpu.memory_space<vmem>>, %arg9: memref<4x64xf32, #tpu.memory_space<vmem>>, %arg10: memref<256x32xf32, #tpu.memory_space<vmem>>) attributes {dimension_semantics = [], scalar_prefetch = 0 : i64, scratch_operands = 0 : i64, tpu.core_type = #tpu.core_type<tc>} {
    %c0 = arith.constant 0 : index
    %c0_0 = arith.constant 0 : index
    %0 = vector.load %arg2[%c0, %c0_0] : memref<4x128xf32, #tpu.memory_space<vmem>>, vector<4x128xf32>
    %c0_1 = arith.constant 0 : index
    %c0_2 = arith.constant 0 : index
    %1 = vector.load %arg3[%c0_1, %c0_2] : memref<128x64xf32, #tpu.memory_space<vmem>>, vector<128x64xf32>
    %cst = arith.constant dense<0.000000e+00> : vector<4x64xf32>
    %2 = tpu.matmul %0, %1, %cst {dimension_numbers = #tpu.dot_dimension_numbers<[1], [0], [0], [1], [0, 0, 1, 1], [], []>} : vector<4x128xf32>, vector<128x64xf32>, vector<4x64xf32> -> vector<4x64xf32>
    %c0_3 = arith.constant 0 : index
    %c0_4 = arith.constant 0 : index
    %3 = vector.load %arg4[%c0_3, %c0_4] : memref<1x64xf32, #tpu.memory_space<vmem>>, vector<1x64xf32>
    %4 = vector.broadcast %3 : vector<1x64xf32> to vector<4x64xf32>
    %5 = arith.addf %2, %4 : vector<4x64xf32>
    %cst_5 = arith.constant 0.000000e+00 : f32
    %6 = vector.broadcast %cst_5 : f32 to vector<4x64xf32>
    %7 = arith.maximumf %5, %6 : vector<4x64xf32>
    %c0_6 = arith.constant 0 : index
    %c0_7 = arith.constant 0 : index
    %8 = vector.load %arg5[%c0_6, %c0_7] : memref<64x64xf32, #tpu.memory_space<vmem>>, vector<64x64xf32>
    %cst_8 = arith.constant dense<0.000000e+00> : vector<4x64xf32>
    %9 = tpu.matmul %7, %8, %cst_8 {dimension_numbers = #tpu.dot_dimension_numbers<[1], [0], [0], [1], [0, 0, 1, 1], [], []>} : vector<4x64xf32>, vector<64x64xf32>, vector<4x64xf32> -> vector<4x64xf32>
    %c0_9 = arith.constant 0 : index
    %c0_10 = arith.constant 0 : index
    %10 = vector.load %arg6[%c0_9, %c0_10] : memref<1x64xf32, #tpu.memory_space<vmem>>, vector<1x64xf32>
    %11 = vector.broadcast %10 : vector<1x64xf32> to vector<4x64xf32>
    %12 = arith.addf %9, %11 : vector<4x64xf32>
    %13 = arith.mulf %12, %12 : vector<4x64xf32>
    %14 = vector.extract_strided_slice %13 {offsets = [0, 0], sizes = [4, 32], strides = [1, 1]} : vector<4x64xf32> to vector<4x32xf32>
    %cst_11 = arith.constant dense<0.000000e+00> : vector<4xf32>
    %15 = vector.multi_reduction <add>, %14, %cst_11 [1] : vector<4x32xf32> to vector<4xf32>
    %16 = vector.shape_cast %15 : vector<4xf32> to vector<4x1xf32>
    %cst_12 = arith.constant 9.99999996E-13 : f32
    %17 = vector.broadcast %cst_12 : f32 to vector<4x1xf32>
    %18 = arith.addf %16, %17 : vector<4x1xf32>
    %19 = math.rsqrt %18 : vector<4x1xf32>
    %20 = vector.extract_strided_slice %13 {offsets = [0, 32], sizes = [4, 32], strides = [1, 1]} : vector<4x64xf32> to vector<4x32xf32>
    %cst_13 = arith.constant dense<0.000000e+00> : vector<4xf32>
    %21 = vector.multi_reduction <add>, %20, %cst_13 [1] : vector<4x32xf32> to vector<4xf32>
    %22 = vector.shape_cast %21 : vector<4xf32> to vector<4x1xf32>
    %cst_14 = arith.constant 9.99999996E-13 : f32
    %23 = vector.broadcast %cst_14 : f32 to vector<4x1xf32>
    %24 = arith.addf %22, %23 : vector<4x1xf32>
    %25 = math.rsqrt %24 : vector<4x1xf32>
    %26 = tpu.iota {dimensions = array<i32: 1>} : vector<4x64xi32>
    %c32_i32 = arith.constant 32 : i32
    %27 = vector.broadcast %c32_i32 : i32 to vector<4x64xi32>
    %28 = arith.cmpi slt, %26, %27 : vector<4x64xi32>
    %29 = vector.shape_cast %19 : vector<4x1xf32> to vector<4x1xf32>
    %30 = vector.broadcast %29 : vector<4x1xf32> to vector<4x64xf32>
    %31 = vector.shape_cast %25 : vector<4x1xf32> to vector<4x1xf32>
    %32 = vector.broadcast %31 : vector<4x1xf32> to vector<4x64xf32>
    %33 = arith.select %28, %30, %32 : vector<4x64xi1>, vector<4x64xf32>
    %34 = arith.mulf %12, %33 : vector<4x64xf32>
    %c0_15 = arith.constant 0 : index
    %c0_16 = arith.constant 0 : index
    %35 = vector.load %arg9[%c0_15, %c0_16] : memref<4x64xf32, #tpu.memory_space<vmem>>, vector<4x64xf32>
    tpu.vector_store %arg9[%c0_15, %c0_16], %34 {strides = array<i32>} : memref<4x64xf32, #tpu.memory_space<vmem>>, vector<4x64xf32>,
    %36 = vector.extract_strided_slice %34 {offsets = [0, 0], sizes = [4, 32], strides = [1, 1]} : vector<4x64xf32> to vector<4x32xf32>
    %37 = vector.extract_strided_slice %34 {offsets = [0, 32], sizes = [4, 32], strides = [1, 1]} : vector<4x64xf32> to vector<4x32xf32>
    %38 = tpu.concatenate %36, %37 in 0 : vector<4x32xf32>, vector<4x32xf32> -> vector<8x32xf32>
    %c0_17 = arith.constant 0 : index
    %c0_18 = arith.constant 0 : index
    %39 = vector.load %arg7[%c0_17, %c0_18] : memref<256x32xf32, #tpu.memory_space<vmem>>, vector<256x32xf32>
    %cst_19 = arith.constant 14.2857141 : f32
    %40 = vector.broadcast %cst_19 : f32 to vector<8x32xf32>
    %41 = arith.mulf %38, %40 : vector<8x32xf32>
    %cst_20 = arith.constant dense<0.000000e+00> : vector<8x256xf32>
    %42 = tpu.matmul %41, %39, %cst_20 {dimension_numbers = #tpu.dot_dimension_numbers<[1], [1], [0], [0], [0, 0, 1, 0], [], []>} : vector<8x32xf32>, vector<256x32xf32>, vector<8x256xf32> -> vector<8x256xf32>
    %43 = vector.extract_strided_slice %42 {offsets = [0, 0], sizes = [4, 128], strides = [1, 1]} : vector<8x256xf32> to vector<4x128xf32>
    %44 = vector.extract_strided_slice %42 {offsets = [4, 128], sizes = [4, 128], strides = [1, 1]} : vector<8x256xf32> to vector<4x128xf32>
    %45 = vector.extract_strided_slice %42 {offsets = [4, 0], sizes = [4, 128], strides = [1, 1]} : vector<8x256xf32> to vector<4x128xf32>
    %46 = vector.extract_strided_slice %42 {offsets = [0, 128], sizes = [4, 128], strides = [1, 1]} : vector<8x256xf32> to vector<4x128xf32>
    %47 = tpu.concatenate %43, %44, %45, %46 in 0 : vector<4x128xf32>, vector<4x128xf32>, vector<4x128xf32>, vector<4x128xf32> -> vector<16x128xf32>
    %c0_21 = arith.constant 0 : index
    %c0_22 = arith.constant 0 : index
    %48 = vector.load %arg0[%c0_21, %c0_22] : memref<4x8xi32, #tpu.memory_space<vmem>>, vector<4x8xi32>
    %49 = tpu.concatenate %48, %48, %48, %48 in 0 : vector<4x8xi32>, vector<4x8xi32>, vector<4x8xi32>, vector<4x8xi32> -> vector<16x8xi32>
    %50 = tpu.iota {dimensions = array<i32: 2>} : vector<16x8x128xi32>
    %51 = vector.shape_cast %49 : vector<16x8xi32> to vector<16x8x1xi32>
    %52 = vector.broadcast %51 : vector<16x8x1xi32> to vector<16x8x128xi32>
    %53 = arith.cmpi eq, %50, %52 : vector<16x8x128xi32>
    %54 = arith.extui %53 : vector<16x8x128xi1> to vector<16x8x128xi32>
    %55 = arith.sitofp %54 : vector<16x8x128xi32> to vector<16x8x128xf32>
    %56 = vector.shape_cast %47 : vector<16x128xf32> to vector<16x1x128xf32>
    %57 = vector.broadcast %56 : vector<16x1x128xf32> to vector<16x8x128xf32>
    %58 = arith.mulf %55, %57 : vector<16x8x128xf32>
    %cst_23 = arith.constant dense<0.000000e+00> : vector<16x8xf32>
    %59 = vector.multi_reduction <add>, %58, %cst_23 [2] : vector<16x8x128xf32> to vector<16x8xf32>
    %60 = vector.extract_strided_slice %59 {offsets = [0, 1], sizes = [8, 7], strides = [1, 1]} : vector<16x8xf32> to vector<8x7xf32>
    %61 = vector.extract_strided_slice %59 {offsets = [8, 0], sizes = [8, 8], strides = [1, 1]} : vector<16x8xf32> to vector<8x8xf32>
    %62 = tpu.iota {dimensions = array<i32: 1>} : vector<8x8xi32>
    %c3_i32 = arith.constant 3 : i32
    %63 = vector.broadcast %c3_i32 : i32 to vector<8x8xi32>
    %64 = arith.cmpi slt, %62, %63 : vector<8x8xi32>
    %65 = arith.extui %64 : vector<8x8xi1> to vector<8x8xi32>
    %66 = arith.sitofp %65 : vector<8x8xi32> to vector<8x8xf32>
    %67 = vector.extract_strided_slice %66 {offsets = [0, 1], sizes = [8, 7], strides = [1, 1]} : vector<8x8xf32> to vector<8x7xf32>
    %cst_24 = arith.constant dense<0xFF800000> : vector<8xf32>
    %68 = vector.multi_reduction <maximumf>, %60, %cst_24 [1] : vector<8x7xf32> to vector<8xf32>
    %69 = vector.shape_cast %68 : vector<8xf32> to vector<8x1xf32>
    %70 = vector.broadcast %69 : vector<8x1xf32> to vector<8x7xf32>
    %71 = arith.subf %60, %70 : vector<8x7xf32>
    %72 = math.exp %71 : vector<8x7xf32>
    %cst_25 = arith.constant dense<0.000000e+00> : vector<8xf32>
    %73 = vector.multi_reduction <add>, %72, %cst_25 [1] : vector<8x7xf32> to vector<8xf32>
    %74 = vector.shape_cast %73 : vector<8xf32> to vector<8x1xf32>
    %75 = math.log %74 : vector<8x1xf32>
    %76 = vector.broadcast %75 : vector<8x1xf32> to vector<8x7xf32>
    %77 = arith.subf %71, %76 : vector<8x7xf32>
    %78 = arith.mulf %67, %77 : vector<8x7xf32>
    %79 = vector.shape_cast %78 : vector<8x7xf32> to vector<1x8x7xf32>
    %cst_26 = arith.constant dense<0.000000e+00> : vector<1xf32>
    %80 = vector.multi_reduction <add>, %79, %cst_26 [1, 2] : vector<1x8x7xf32> to vector<1xf32>
    %81 = vector.shape_cast %80 : vector<1xf32> to vector<1x1x1xf32>
    %82 = vector.extract %81[0, 0, 0] : f32 from vector<1x1x1xf32>
    %cst_27 = arith.constant 0.000000e+00 : f32
    %83 = arith.subf %cst_27, %82 : f32
    %cst_28 = arith.constant 8.000000e+00 : f32
    %84 = arith.divf %83, %cst_28 : f32
    %cst_29 = arith.constant dense<0xFF800000> : vector<8xf32>
    %85 = vector.multi_reduction <maximumf>, %61, %cst_29 [1] : vector<8x8xf32> to vector<8xf32>
    %86 = vector.shape_cast %85 : vector<8xf32> to vector<8x1xf32>
    %87 = vector.broadcast %86 : vector<8x1xf32> to vector<8x8xf32>
    %88 = arith.subf %61, %87 : vector<8x8xf32>
    %89 = math.exp %88 : vector<8x8xf32>
    %cst_30 = arith.constant dense<0.000000e+00> : vector<8xf32>
    %90 = vector.multi_reduction <add>, %89, %cst_30 [1] : vector<8x8xf32> to vector<8xf32>
    %91 = vector.shape_cast %90 : vector<8xf32> to vector<8x1xf32>
    %92 = math.log %91 : vector<8x1xf32>
    %93 = vector.broadcast %92 : vector<8x1xf32> to vector<8x8xf32>
    %94 = arith.subf %88, %93 : vector<8x8xf32>
    %95 = arith.mulf %66, %94 : vector<8x8xf32>
    %96 = vector.shape_cast %95 : vector<8x8xf32> to vector<1x8x8xf32>
    %cst_31 = arith.constant dense<0.000000e+00> : vector<1xf32>
    %97 = vector.multi_reduction <add>, %96, %cst_31 [1, 2] : vector<1x8x8xf32> to vector<1xf32>
    %98 = vector.shape_cast %97 : vector<1xf32> to vector<1x1x1xf32>
    %99 = vector.extract %98[0, 0, 0] : f32 from vector<1x1x1xf32>
    %cst_32 = arith.constant 0.000000e+00 : f32
    %100 = arith.subf %cst_32, %99 : f32
    %cst_33 = arith.constant 1.200000e+01 : f32
    %101 = arith.divf %100, %cst_33 : f32
    %cst_34 = arith.constant 2.500000e-01 : f32
    %102 = vector.broadcast %cst_34 : f32 to vector<8x7xf32>
    %103 = arith.mulf %60, %102 : vector<8x7xf32>
    %cst_35 = arith.constant dense<0xFF800000> : vector<8xf32>
    %104 = vector.multi_reduction <maximumf>, %103, %cst_35 [1] : vector<8x7xf32> to vector<8xf32>
    %105 = vector.shape_cast %104 : vector<8xf32> to vector<8x1xf32>
    %106 = vector.broadcast %105 : vector<8x1xf32> to vector<8x7xf32>
    %107 = arith.subf %103, %106 : vector<8x7xf32>
    %108 = math.exp %107 : vector<8x7xf32>
    %cst_36 = arith.constant dense<0.000000e+00> : vector<8xf32>
    %109 = vector.multi_reduction <add>, %108, %cst_36 [1] : vector<8x7xf32> to vector<8xf32>
    %110 = vector.shape_cast %109 : vector<8xf32> to vector<8x1xf32>
    %111 = math.log %110 : vector<8x1xf32>
    %112 = vector.broadcast %111 : vector<8x1xf32> to vector<8x7xf32>
    %113 = arith.subf %107, %112 : vector<8x7xf32>
    %114 = math.exp %113 : vector<8x7xf32>
    %115 = vector.extract_strided_slice %114 {offsets = [4, 0], sizes = [4, 7], strides = [1, 1]} : vector<8x7xf32> to vector<4x7xf32>
    %116 = vector.extract_strided_slice %114 {offsets = [0, 0], sizes = [4, 7], strides = [1, 1]} : vector<8x7xf32> to vector<4x7xf32>
    %117 = arith.subf %115, %116 : vector<4x7xf32>
    %118 = vector.extract_strided_slice %113 {offsets = [4, 0], sizes = [4, 7], strides = [1, 1]} : vector<8x7xf32> to vector<4x7xf32>
    %119 = vector.extract_strided_slice %113 {offsets = [0, 0], sizes = [4, 7], strides = [1, 1]} : vector<8x7xf32> to vector<4x7xf32>
    %120 = arith.subf %118, %119 : vector<4x7xf32>
    %121 = arith.mulf %117, %120 : vector<4x7xf32>
    %122 = vector.shape_cast %121 : vector<4x7xf32> to vector<1x4x7xf32>
    %cst_37 = arith.constant dense<0.000000e+00> : vector<1xf32>
    %123 = vector.multi_reduction <add>, %122, %cst_37 [1, 2] : vector<1x4x7xf32> to vector<1xf32>
    %124 = vector.shape_cast %123 : vector<1xf32> to vector<1x1x1xf32>
    %125 = vector.extract %124[0, 0, 0] : f32 from vector<1x1x1xf32>
    %cst_38 = arith.constant 4.000000e+00 : f32
    %126 = arith.mulf %125, %cst_38 : f32
    %cst_39 = arith.constant 2.500000e-01 : f32
    %127 = vector.broadcast %cst_39 : f32 to vector<8x8xf32>
    %128 = arith.mulf %61, %127 : vector<8x8xf32>
    %cst_40 = arith.constant dense<0xFF800000> : vector<8xf32>
    %129 = vector.multi_reduction <maximumf>, %128, %cst_40 [1] : vector<8x8xf32> to vector<8xf32>
    %130 = vector.shape_cast %129 : vector<8xf32> to vector<8x1xf32>
    %131 = vector.broadcast %130 : vector<8x1xf32> to vector<8x8xf32>
    %132 = arith.subf %128, %131 : vector<8x8xf32>
    %133 = math.exp %132 : vector<8x8xf32>
    %cst_41 = arith.constant dense<0.000000e+00> : vector<8xf32>
    %134 = vector.multi_reduction <add>, %133, %cst_41 [1] : vector<8x8xf32> to vector<8xf32>
    %135 = vector.shape_cast %134 : vector<8xf32> to vector<8x1xf32>
    %136 = math.log %135 : vector<8x1xf32>
    %137 = vector.broadcast %136 : vector<8x1xf32> to vector<8x8xf32>
    %138 = arith.subf %132, %137 : vector<8x8xf32>
    %139 = math.exp %138 : vector<8x8xf32>
    %140 = vector.extract_strided_slice %139 {offsets = [4, 0], sizes = [4, 8], strides = [1, 1]} : vector<8x8xf32> to vector<4x8xf32>
    %141 = vector.extract_strided_slice %139 {offsets = [0, 0], sizes = [4, 8], strides = [1, 1]} : vector<8x8xf32> to vector<4x8xf32>
    %142 = arith.subf %140, %141 : vector<4x8xf32>
    %143 = vector.extract_strided_slice %138 {offsets = [4, 0], sizes = [4, 8], strides = [1, 1]} : vector<8x8xf32> to vector<4x8xf32>
    %144 = vector.extract_strided_slice %138 {offsets = [0, 0], sizes = [4, 8], strides = [1, 1]} : vector<8x8xf32> to vector<4x8xf32>
    %145 = arith.subf %143, %144 : vector<4x8xf32>
    %146 = arith.mulf %142, %145 : vector<4x8xf32>
    %147 = vector.shape_cast %146 : vector<4x8xf32> to vector<1x4x8xf32>
    %cst_42 = arith.constant dense<0.000000e+00> : vector<1xf32>
    %148 = vector.multi_reduction <add>, %147, %cst_42 [1, 2] : vector<1x4x8xf32> to vector<1xf32>
    %149 = vector.shape_cast %148 : vector<1xf32> to vector<1x1x1xf32>
    %150 = vector.extract %149[0, 0, 0] : f32 from vector<1x1x1xf32>
    %cst_43 = arith.constant 4.000000e+00 : f32
    %151 = arith.mulf %150, %cst_43 : f32
    %152 = tpu.iota {dimensions = array<i32: 1>} : vector<1x4xi32>
    %c0_i32 = arith.constant 0 : i32
    %153 = vector.broadcast %c0_i32 : i32 to vector<1x4xi32>
    %154 = arith.cmpi eq, %152, %153 : vector<1x4xi32>
    %cst_44 = arith.constant 0.000000e+00 : f32
    %155 = vector.broadcast %84 : f32 to vector<1x4xf32>
    %156 = vector.broadcast %cst_44 : f32 to vector<1x4xf32>
    %157 = arith.select %154, %155, %156 : vector<1x4xi1>, vector<1x4xf32>
    %c1_i32 = arith.constant 1 : i32
    %158 = vector.broadcast %c1_i32 : i32 to vector<1x4xi32>
    %159 = arith.cmpi eq, %152, %158 : vector<1x4xi32>
    %cst_45 = arith.constant 0.000000e+00 : f32
    %160 = vector.broadcast %126 : f32 to vector<1x4xf32>
    %161 = vector.broadcast %cst_45 : f32 to vector<1x4xf32>
    %162 = arith.select %159, %160, %161 : vector<1x4xi1>, vector<1x4xf32>
    %163 = arith.addf %157, %162 : vector<1x4xf32>
    %c2_i32 = arith.constant 2 : i32
    %164 = vector.broadcast %c2_i32 : i32 to vector<1x4xi32>
    %165 = arith.cmpi eq, %152, %164 : vector<1x4xi32>
    %cst_46 = arith.constant 0.000000e+00 : f32
    %166 = vector.broadcast %101 : f32 to vector<1x4xf32>
    %167 = vector.broadcast %cst_46 : f32 to vector<1x4xf32>
    %168 = arith.select %165, %166, %167 : vector<1x4xi1>, vector<1x4xf32>
    %169 = arith.addf %163, %168 : vector<1x4xf32>
    %c3_i32_47 = arith.constant 3 : i32
    %170 = vector.broadcast %c3_i32_47 : i32 to vector<1x4xi32>
    %171 = arith.cmpi eq, %152, %170 : vector<1x4xi32>
    %cst_48 = arith.constant 0.000000e+00 : f32
    %172 = vector.broadcast %151 : f32 to vector<1x4xf32>
    %173 = vector.broadcast %cst_48 : f32 to vector<1x4xf32>
    %174 = arith.select %171, %172, %173 : vector<1x4xi1>, vector<1x4xf32>
    %175 = arith.addf %169, %174 : vector<1x4xf32>
    %c0_49 = arith.constant 0 : index
    %c0_50 = arith.constant 0 : index
    %176 = vector.load %arg8[%c0_49, %c0_50] : memref<1x4xf32, #tpu.memory_space<vmem>>, vector<1x4xf32>
    tpu.vector_store %arg8[%c0_49, %c0_50], %175 {strides = array<i32>} : memref<1x4xf32, #tpu.memory_space<vmem>>, vector<1x4xf32>,
    %c0_51 = arith.constant 0 : index
    %c0_52 = arith.constant 0 : index
    %177 = vector.load %arg1[%c0_51, %c0_52] : memref<1x4xi32, #tpu.memory_space<vmem>>, vector<1x4xi32>
    %c128_i32 = arith.constant 128 : i32
    %178 = vector.broadcast %c128_i32 : i32 to vector<1x4xi32>
    %179 = arith.addi %177, %178 : vector<1x4xi32>
    %180 = tpu.concatenate %177, %179 in 1 : vector<1x4xi32>, vector<1x4xi32> -> vector<1x8xi32>
    %181 = vector.extract_strided_slice %48 {offsets = [0, 0], sizes = [4, 1], strides = [1, 1]} : vector<4x8xi32> to vector<4x1xi32>
    %182 = vector.extract_strided_slice %48 {offsets = [0, 0], sizes = [4, 1], strides = [1, 1]} : vector<4x8xi32> to vector<4x1xi32>
    %c128_i32_53 = arith.constant 128 : i32
    %183 = vector.broadcast %c128_i32_53 : i32 to vector<4x1xi32>
    %184 = arith.addi %182, %183 : vector<4x1xi32>
    %185 = tpu.concatenate %181, %184 in 0 : vector<4x1xi32>, vector<4x1xi32> -> vector<8x1xi32>
    %186 = tpu.iota {dimensions = array<i32: 1>} : vector<8x256xi32>
    %187 = vector.broadcast %185 : vector<8x1xi32> to vector<8x256xi32>
    %188 = arith.cmpi eq, %186, %187 : vector<8x256xi32>
    %189 = arith.extui %188 : vector<8x256xi1> to vector<8x256xi32>
    %190 = arith.sitofp %189 : vector<8x256xi32> to vector<8x256xf32>
    %191 = tpu.iota {dimensions = array<i32: 0>} : vector<256x8xi32>
    %192 = vector.broadcast %180 : vector<1x8xi32> to vector<256x8xi32>
    %193 = arith.cmpi eq, %191, %192 : vector<256x8xi32>
    %194 = arith.extui %193 : vector<256x8xi1> to vector<256x8xi32>
    %195 = arith.sitofp %194 : vector<256x8xi32> to vector<256x8xf32>
    %cst_54 = arith.constant dense<0.000000e+00> : vector<8x32xf32>
    %196 = tpu.matmul %190, %39, %cst_54 {dimension_numbers = #tpu.dot_dimension_numbers<[1], [0], [0], [1], [0, 0, 1, 1], [], []>} : vector<8x256xf32>, vector<256x32xf32>, vector<8x32xf32> -> vector<8x32xf32>
    %cst_55 = arith.constant 5.000000e-01 : f32
    %197 = vector.broadcast %cst_55 : f32 to vector<8x32xf32>
    %198 = arith.mulf %196, %197 : vector<8x32xf32>
    %cst_56 = arith.constant 5.000000e-01 : f32
    %199 = vector.broadcast %cst_56 : f32 to vector<8x32xf32>
    %200 = arith.mulf %38, %199 : vector<8x32xf32>
    %201 = arith.addf %198, %200 : vector<8x32xf32>
    %202 = arith.mulf %201, %201 : vector<8x32xf32>
    %cst_57 = arith.constant dense<0.000000e+00> : vector<8xf32>
    %203 = vector.multi_reduction <add>, %202, %cst_57 [1] : vector<8x32xf32> to vector<8xf32>
    %204 = vector.shape_cast %203 : vector<8xf32> to vector<8x1xf32>
    %cst_58 = arith.constant 9.99999996E-13 : f32
    %205 = vector.broadcast %cst_58 : f32 to vector<8x1xf32>
    %206 = arith.addf %204, %205 : vector<8x1xf32>
    %207 = math.rsqrt %206 : vector<8x1xf32>
    %208 = vector.broadcast %207 : vector<8x1xf32> to vector<8x32xf32>
    %209 = arith.mulf %201, %208 : vector<8x32xf32>
    %cst_59 = arith.constant dense<0.000000e+00> : vector<256x32xf32>
    %210 = tpu.matmul %195, %209, %cst_59 {dimension_numbers = #tpu.dot_dimension_numbers<[1], [0], [0], [1], [0, 0, 1, 1], [], []>} : vector<256x8xf32>, vector<8x32xf32>, vector<256x32xf32> -> vector<256x32xf32>
    %cst_60 = arith.constant dense<0.000000e+00> : vector<256xf32>
    %211 = vector.multi_reduction <add>, %195, %cst_60 [1] : vector<256x8xf32> to vector<256xf32>
    %212 = vector.shape_cast %211 : vector<256xf32> to vector<256x1xf32>
    %cst_61 = arith.constant 5.000000e-01 : f32
    %213 = vector.broadcast %cst_61 : f32 to vector<256x1xf32>
    %214 = arith.cmpf ogt, %212, %213 : vector<256x1xf32>
    %215 = vector.shape_cast %214 : vector<256x1xi1> to vector<256x1xi1>
    %216 = vector.broadcast %215 : vector<256x1xi1> to vector<256x32xi1>
    %217 = arith.select %216, %210, %39 : vector<256x32xi1>, vector<256x32xf32>
    %c0_62 = arith.constant 0 : index
    %c0_63 = arith.constant 0 : index
    %218 = vector.load %arg10[%c0_62, %c0_63] : memref<256x32xf32, #tpu.memory_space<vmem>>, vector<256x32xf32>
    tpu.vector_store %arg10[%c0_62, %c0_63], %217 {strides = array<i32>} : memref<256x32xf32, #tpu.memory_space<vmem>>, vector<256x32xf32>,
    return
  }
}

</mosaic_0001>

<llo_original>
// kernel: sup_mcl_step.1
$region0: #{sup_mcl_step.1}
  #allocation0 [shape = 'u32[]', space=smem, size = 0x4, offset = 0x4, fixed_abs, tag = 'smem constant byte address 0x4 - core index']
  #allocation1 [shape = 'u32[144,128]{1,0:T(1,128)}', space=vmem, size = 0x12000, scoped, tag = 'internal scratch']
  %s0 = inlined_call_operand.vmem [shape: s32[4,8], index: 0, kind: input, shape index: {}]
  %s1 = inlined_call_operand.vmem [shape: s32[1,4], index: 1, kind: input, shape index: {}]
  %s2 = inlined_call_operand.vmem [shape: f32[4,128], index: 2, kind: input, shape index: {}]
  %s3 = inlined_call_operand.vmem [shape: f32[128,64], index: 3, kind: input, shape index: {}]
  %s4 = inlined_call_operand.vmem [shape: f32[1,64], index: 4, kind: input, shape index: {}]
  %s5 = inlined_call_operand.vmem [shape: f32[64,64], index: 5, kind: input, shape index: {}]
  %s6 = inlined_call_operand.vmem [shape: f32[1,64], index: 6, kind: input, shape index: {}]
  %s7 = inlined_call_operand.vmem [shape: f32[256,32], index: 7, kind: input, shape index: {}, may-alias: {7,10}]
  %s8 = inlined_call_operand.hbm [shape: f32[1,4], index: 8, kind: output, shape index: {0}]
  %s9 = inlined_call_operand.hbm [shape: f32[4,64], index: 9, kind: output, shape index: {1}]
  %s10 = inlined_call_operand.vmem [shape: f32[256,32], index: 10, kind: output, shape index: {2}, may-alias: {7,10}]
  %11 = xla_tuple %s8, %s9, %s10
  %s12 = sld [smem:[#allocation0]]
  $region58: #{sup_mcl_step.1} parent=0
    _
  %s14 = ssub.s32 1, %s12
  %s15 = scalar_select 0, %s14, %s12
  $region1: #{sup_mcl_step.1} parent=0
    #allocation2 [shape = 'u8[512]{0}', space=vmem, size = 0x400, scoped, tag = 'output window, operand 0, single buffered']
    #allocation3 [shape = 's32[1]{0}', space=sflag, size = 0x4, scoped, tag = 'scoped memory for sup_mcl_step.1']
    #allocation4 [shape = 'u8[2048]{0}', space=vmem, size = 0x800, scoped, tag = 'output window, operand 1, single buffered']
    #allocation5 [shape = 's32[1]{0}', space=sflag, size = 0x4, scoped, tag = 'scoped memory for sup_mcl_step.1']
    %16 = vsyncpa [#allocation3], 0
    %17 = vsyncpa [#allocation5], 0
    // Predicated region
    $region2: #{sup_mcl_step.1} parent=1 // pred_check
      _
    $region3: #{sup_mcl_step.1} parent=1 // pred_check_branch
      %19 = sbr.rel (0) target = $region5
    $region4: #{sup_mcl_step.1} parent=1 // pred_region
      _
    $region5: #{sup_mcl_step.1} parent=1 // pred_fallthru
      _
    // Predicated region
    $region6: #{sup_mcl_step.1} parent=1 // pred_check
      _
    $region7: #{sup_mcl_step.1} parent=1 // pred_check_branch
      %21 = sbr.rel (0) target = $region9
    $region8: #{sup_mcl_step.1} parent=1 // pred_region
      _
    $region9: #{sup_mcl_step.1} parent=1 // pred_fallthru
      _
    // Predicated region
    $region10: #{sup_mcl_step.1} parent=1 // pred_check
      _
    $region11: #{sup_mcl_step.1} parent=1 // pred_check_branch
      %23 = sbr.rel (0) target = $region13
    $region12: #{sup_mcl_step.1} parent=1 // pred_region
      _
    $region13: #{sup_mcl_step.1} parent=1 // pred_fallthru
      _
    // Predicated region
    $region14: #{sup_mcl_step.1} parent=1 // pred_check
      _
    $region15: #{sup_mcl_step.1} parent=1 // pred_check_branch
      %25 = sbr.rel (0) target = $region17
    $region16: #{sup_mcl_step.1} parent=1 // pred_region
      _
    $region17: #{sup_mcl_step.1} parent=1 // pred_fallthru
      _
    // Predicated region
    $region18: #{sup_mcl_step.1} parent=1 // pred_check
      _
    $region19: #{sup_mcl_step.1} parent=1 // pred_check_branch
      %27 = sbr.rel (0) target = $region21
    $region20: #{sup_mcl_step.1} parent=1 // pred_region
      _
    $region21: #{sup_mcl_step.1} parent=1 // pred_fallthru
      _
    // Predicated region
    $region22: #{sup_mcl_step.1} parent=1 // pred_check
      _
    $region23: #{sup_mcl_step.1} parent=1 // pred_check_branch
      %29 = sbr.rel (0) target = $region25
    $region24: #{sup_mcl_step.1} parent=1 // pred_region
      _
    $region25: #{sup_mcl_step.1} parent=1 // pred_fallthru
      _
    // Predicated region
    $region26: #{sup_mcl_step.1} parent=1 // pred_check
      _
    $region27: #{sup_mcl_step.1} parent=1 // pred_check_branch
      %31 = sbr.rel (0) target = $region29
    $region28: #{sup_mcl_step.1} parent=1 // pred_region
      _
    $region29: #{sup_mcl_step.1} parent=1 // pred_fallthru
      _
    // Predicated region
    $region30: #{sup_mcl_step.1} parent=1 // pred_check
      _
    $region31: #{sup_mcl_step.1} parent=1 // pred_check_branch
      %33 = sbr.rel (0) target = $region33
    $region32: #{sup_mcl_step.1} parent=1 // pred_region
      _
    $region33: #{sup_mcl_step.1} parent=1 // pred_fallthru
      _
    %v34 = vld [vmem:[%s2] sm:$0xf]
    %v35 = vld [vmem:[%s3] sm:$0xff]
    %v36 = vld [vmem:[%s3 + $0x8] sm:$0xff]
    %v37 = vld [vmem:[%s3 + $0x10] sm:$0xff]
    %v38 = vld [vmem:[%s3 + $0x18] sm:$0xff]
    %v39 = vld [vmem:[%s3 + $0x20] sm:$0xff]
    %v40 = vld [vmem:[%s3 + $0x28] sm:$0xff]
    %v41 = vld [vmem:[%s3 + $0x30] sm:$0xff]
    %v42 = vld [vmem:[%s3 + $0x38] sm:$0xff]
    %v43 = vld [vmem:[%s3 + $0x40] sm:$0xff]
    %v44 = vld [vmem:[%s3 + $0x48] sm:$0xff]
    %v45 = vld [vmem:[%s3 + $0x50] sm:$0xff]
    %v46 = vld [vmem:[%s3 + $0x58] sm:$0xff]
    %v47 = vld [vmem:[%s3 + $0x60] sm:$0xff]
    %v48 = vld [vmem:[%s3 + $0x68] sm:$0xff]
    %v49 = vld [vmem:[%s3 + $0x70] sm:$0xff]
    %v50 = vld [vmem:[%s3 + $0x78] sm:$0xff]
    %v51 = vld [vmem:[%s4] sm:$0x1]
    %v53 = vlaneseq
    %v54 = vshrl.u32 %v53, 7
    %v55 = vsub.s32 0, %v54
    %v56 = vrot.slane %v51, %v55
    %58 = vmatprep.subr.mxu0 0.0
    %59 = vmatpush1.msra.mxu0 %v35
    %60 = vmatprep.subr.mxu0 0.0
    %61 = vmatpush1.msra.mxu0 %v36
    %62 = vmatprep.subr.mxu0 0.0
    %63 = vmatpush1.msra.mxu0 %v37
    %64 = vmatprep.subr.mxu0 0.0
    %65 = vmatpush1.msra.mxu0 %v38
    %66 = vmatprep.subr.mxu0 0.0
    %67 = vmatpush1.msra.mxu0 %v39
    %68 = vmatprep.subr.mxu0 0.0
    %69 = vmatpush1.msra.mxu0 %v40
    %70 = vmatprep.subr.mxu0 0.0
    %71 = vmatpush1.msra.mxu0 %v41
    %72 = vmatprep.subr.mxu0 0.0
    %73 = vmatpush1.msra.mxu0 %v42
    %74 = vmatprep.subr.mxu0 0.0
    %75 = vmatpush1.msra.mxu0 %v43
    %76 = vmatprep.subr.mxu0 0.0
    %77 = vmatpush1.msra.mxu0 %v44
    %78 = vmatprep.subr.mxu0 0.0
    %79 = vmatpush1.msra.mxu0 %v45
    %80 = vmatprep.subr.mxu0 0.0
    %81 = vmatpush1.msra.mxu0 %v46
    %82 = vmatprep.subr.mxu0 0.0
    %83 = vmatpush1.msra.mxu0 %v47
    %84 = vmatprep.subr.mxu0 0.0
    %85 = vmatpush1.msra.mxu0 %v48
    %86 = vmatprep.subr.mxu0 0.0
    %87 = vmatpush1.msra.mxu0 %v49
    %88 = vmatprep.subr.mxu0 0.0
    %89 = vmatpush1.msra.mxu0 %v50
    %90 = vmatprep.subr.mxu0 0.0
    %91 = vmatpush1.msra.mxu0 0.0
    %92 = vmatprep.subr.mxu0 0.0
    %93 = vmatpush1.msra.mxu0 0.0
    %94 = vmatprep.subr.mxu0 0.0
    %95 = vmatpush1.msra.mxu0 0.0
    %96 = vmatprep.subr.mxu0 0.0
    %97 = vmatpush1.msra.mxu0 0.0
    %98 = vmatprep.subr.mxu0 0.0
    %99 = vmatpush1.msra.mxu0 0.0
    %100 = vmatprep.subr.mxu0 0.0
    %101 = vmatpush1.msra.mxu0 0.0
    %102 = vmatprep.subr.mxu0 0.0
    %103 = vmatpush1.msra.mxu0 0.0
    %104 = vmatprep.subr.mxu0 0.0
    %105 = vmatpush1.msra.mxu0 0.0
    %106 = vmatprep.subr.mxu0 0.0
    %107 = vmatpush1.msra.mxu0 0.0
    %108 = vmatprep.subr.mxu0 0.0
    %109 = vmatpush1.msra.mxu0 0.0
    %110 = vmatprep.subr.mxu0 0.0
    %111 = vmatpush1.msra.mxu0 0.0
    %112 = vmatprep.subr.mxu0 0.0
    %113 = vmatpush1.msra.mxu0 0.0
    %114 = vmatprep.subr.mxu0 0.0
    %115 = vmatpush1.msra.mxu0 0.0
    %116 = vmatprep.subr.mxu0 0.0
    %117 = vmatpush1.msra.mxu0 0.0
    %118 = vmatprep.subr.mxu0 0.0
    %119 = vmatpush1.msra.mxu0 0.0
    %120 = vmatprep.subr.mxu0 0.0
    %121 = vmatpush1.msra.mxu0 0.0
    %122 = vmatprep.mubr.f32.mxu0 0.0
    %123 = vmatmul.mubr.f32.gmra.mrb[0].mxu0 %v34
    %v124 = vpop.f32.mrb[0].mxu0
    %v125 = vadd.f32 %v56, %v124
    %v126 = vpop.f32.mrb[0].mxu0
    %127 = vdwg.mxu0
    %v128 = vmax.f32 %v125, 0.0
    %v129 = vld [vmem:[%s5] sm:$0xff]
    %v130 = vld [vmem:[%s5 + $0x8] sm:$0xff]
    %v131 = vld [vmem:[%s5 + $0x10] sm:$0xff]
    %v132 = vld [vmem:[%s5 + $0x18] sm:$0xff]
    %v133 = vld [vmem:[%s5 + $0x20] sm:$0xff]
    %v134 = vld [vmem:[%s5 + $0x28] sm:$0xff]
    %v135 = vld [vmem:[%s5 + $0x30] sm:$0xff]
    %v136 = vld [vmem:[%s5 + $0x38] sm:$0xff]
    %v137 = vld [vmem:[%s6] sm:$0x1]
    %v139 = vlaneseq
    %v140 = vshrl.u32 %v139, 7
    %v141 = vsub.s32 0, %v140
    %v142 = vrot.slane %v137, %v141
    %vm144 = vcmask 523264
    %v146 = vsel %vm144, %v128, 0
    %148 = vmatprep.subr.mxu0 0.0
    %149 = vmatpush1.msra.mxu0 %v129
    %150 = vmatprep.subr.mxu0 0.0
    %151 = vmatpush1.msra.mxu0 %v130
    %152 = vmatprep.subr.mxu0 0.0
    %153 = vmatpush1.msra.mxu0 %v131
    %154 = vmatprep.subr.mxu0 0.0
    %155 = vmatpush1.msra.mxu0 %v132
    %156 = vmatprep.subr.mxu0 0.0
    %157 = vmatpush1.msra.mxu0 %v133
    %158 = vmatprep.subr.mxu0 0.0
    %159 = vmatpush1.msra.mxu0 %v134
    %160 = vmatprep.subr.mxu0 0.0
    %161 = vmatpush1.msra.mxu0 %v135
    %162 = vmatprep.subr.mxu0 0.0
    %163 = vmatpush1.msra.mxu0 %v136
    %164 = vmatprep.subr.mxu0 0.0
    %165 = vmatpush1.msra.mxu0 0.0
    %166 = vmatprep.subr.mxu0 0.0
    %167 = vmatpush1.msra.mxu0 0.0
    %168 = vmatprep.subr.mxu0 0.0
    %169 = vmatpush1.msra.mxu0 0.0
    %170 = vmatprep.subr.mxu0 0.0
    %171 = vmatpush1.msra.mxu0 0.0
    %172 = vmatprep.subr.mxu0 0.0
    %173 = vmatpush1.msra.mxu0 0.0
    %174 = vmatprep.subr.mxu0 0.0
    %175 = vmatpush1.msra.mxu0 0.0
    %176 = vmatprep.subr.mxu0 0.0
    %177 = vmatpush1.msra.mxu0 0.0
    %178 = vmatprep.subr.mxu0 0.0
    %179 = vmatpush1.msra.mxu0 0.0
    %180 = vmatprep.subr.mxu0 0.0
    %181 = vmatpush1.msra.mxu0 0.0
    %182 = vmatprep.subr.mxu0 0.0
    %183 = vmatpush1.msra.mxu0 0.0
    %184 = vmatprep.subr.mxu0 0.0
    %185 = vmatpush1.msra.mxu0 0.0
    %186 = vmatprep.subr.mxu0 0.0
    %187 = vmatpush1.msra.mxu0 0.0
    %188 = vmatprep.subr.mxu0 0.0
    %189 = vmatpush1.msra.mxu0 0.0
    %190 = vmatprep.subr.mxu0 0.0
    %191 = vmatpush1.msra.mxu0 0.0
    %192 = vmatprep.subr.mxu0 0.0
    %193 = vmatpush1.msra.mxu0 0.0
    %194 = vmatprep.subr.mxu0 0.0
    %195 = vmatpush1.msra.mxu0 0.0
    %196 = vmatprep.subr.mxu0 0.0
    %197 = vmatpush1.msra.mxu0 0.0
    %198 = vmatprep.subr.mxu0 0.0
    %199 = vmatpush1.msra.mxu0 0.0
    %200 = vmatprep.subr.mxu0 0.0
    %201 = vmatpush1.msra.mxu0 0.0
    %202 = vmatprep.subr.mxu0 0.0
    %203 = vmatpush1.msra.mxu0 0.0
    %204 = vmatprep.subr.mxu0 0.0
    %205 = vmatpush1.msra.mxu0 0.0
    %206 = vmatprep.subr.mxu0 0.0
    %207 = vmatpush1.msra.mxu0 0.0
    %208 = vmatprep.subr.mxu0 0.0
    %209 = vmatpush1.msra.mxu0 0.0
    %210 = vmatprep.subr.mxu0 0.0
    %211 = vmatpush1.msra.mxu0 0.0
    %212 = vmatprep.mubr.f32.mxu0 0.0
    %213 = vmatmul.mubr.f32.gmra.mrb[0].mxu0 %v146
    %v214 = vpop.f32.mrb[0].mxu0
    %v215 = vadd.f32 %v142, %v214
    %v216 = vpop.f32.mrb[0].mxu0
    %217 = vdwg.mxu0
    %v218 = vmul.f32 %v215, %v215
    %vm219 = vcmask 257024
    %v220 = vsel %vm219, %v218, 0.0
    %221 = vadd.xlane.f32.xlu0 %v220
    %v222 = vpop.xlane.xlu0 %221
    %v223 = vadd.f32 %v222, 1e-12
    %v224 = vrsqrt.pop %v223
    %226 = vrot.lane.b32.xlu0 %v218, 96
    %v227 = vpop.permute.xlu0 %226
    %v229 = vsel %vm219, %v227, 0.0
    %230 = vadd.xlane.f32.xlu0 %v229
    %v231 = vpop.xlane.xlu0 %230
    %v232 = vadd.f32 %v231, 1e-12
    %v233 = vrsqrt.pop %v232
    %v234 = vlaneseq
    %v235 = vand.u32 %v234, 127
    %vm236 = vcmp.lt.s32.totalorder %v235, 32
    %v237 = vsel %vm236, %v224, %v233
    %v238 = vmul.f32 %v215, %v237
    %vm239 = vcmask 519168
    %240 = vst.msk [vmem:[#allocation4] sm:$0xf] %vm239, %v238
    %v242 = vrot.slane %v238, 4
    %243 = vrot.lane.b32.xlu0 %v242, 96
    %v244 = vpop.permute.xlu0 %243
    %vm246 = vcmask 1043456
    %v247 = vsel %vm246, %v238, %v244
    %v248 = vld [vmem:[%s7] sm:$0xff]
    %v249 = vld [vmem:[%s7 + $0x8] sm:$0xff]
    %v250 = vld [vmem:[%s7 + $0x10] sm:$0xff]
    %v251 = vld [vmem:[%s7 + $0x18] sm:$0xff]
    %v252 = vld [vmem:[%s7 + $0x20] sm:$0xff]
    %v253 = vld [vmem:[%s7 + $0x28] sm:$0xff]
    %v254 = vld [vmem:[%s7 + $0x30] sm:$0xff]
    %v255 = vld [vmem:[%s7 + $0x38] sm:$0xff]
    %v256 = vld [vmem:[%s7 + $0x40] sm:$0xff]
    %v257 = vld [vmem:[%s7 + $0x48] sm:$0xff]
    %v258 = vld [vmem:[%s7 + $0x50] sm:$0xff]
    %v259 = vld [vmem:[%s7 + $0x58] sm:$0xff]
    %v260 = vld [vmem:[%s7 + $0x60] sm:$0xff]
    %v261 = vld [vmem:[%s7 + $0x68] sm:$0xff]
    %v262 = vld [vmem:[%s7 + $0x70] sm:$0xff]
    %v263 = vld [vmem:[%s7 + $0x78] sm:$0xff]
    %v264 = vld [vmem:[%s7 + $0x80] sm:$0xff]
    %v265 = vld [vmem:[%s7 + $0x88] sm:$0xff]
    %v266 = vld [vmem:[%s7 + $0x90] sm:$0xff]
    %v267 = vld [vmem:[%s7 + $0x98] sm:$0xff]
    %v268 = vld [vmem:[%s7 + $0xa0] sm:$0xff]
    %v269 = vld [vmem:[%s7 + $0xa8] sm:$0xff]
    %v270 = vld [vmem:[%s7 + $0xb0] sm:$0xff]
    %v271 = vld [vmem:[%s7 + $0xb8] sm:$0xff]
    %v272 = vld [vmem:[%s7 + $0xc0] sm:$0xff]
    %v273 = vld [vmem:[%s7 + $0xc8] sm:$0xff]
    %v274 = vld [vmem:[%s7 + $0xd0] sm:$0xff]
    %v275 = vld [vmem:[%s7 + $0xd8] sm:$0xff]
    %v276 = vld [vmem:[%s7 + $0xe0] sm:$0xff]
    %v277 = vld [vmem:[%s7 + $0xe8] sm:$0xff]
    %v278 = vld [vmem:[%s7 + $0xf0] sm:$0xff]
    %v279 = vld [vmem:[%s7 + $0xf8] sm:$0xff]
    %v280 = vmul.f32 %v247, 14.285714
    %vm281 = vcmask 261120
    %v283 = vsel %vm281, %v280, 0
    %v286 = vsel %vm281, %v248, 0
    %v289 = vsel %vm281, %v249, 0
    %v292 = vsel %vm281, %v250, 0
    %v295 = vsel %vm281, %v251, 0
    %v298 = vsel %vm281, %v252, 0
    %v301 = vsel %vm281, %v253, 0
    %v304 = vsel %vm281, %v254, 0
    %v307 = vsel %vm281, %v255, 0
    %v310 = vsel %vm281, %v256, 0
    %v313 = vsel %vm281, %v257, 0
    %v316 = vsel %vm281, %v258, 0
    %v319 = vsel %vm281, %v259, 0
    %v322 = vsel %vm281, %v260, 0
    %v325 = vsel %vm281, %v261, 0
    %v328 = vsel %vm281, %v262, 0
    %v331 = vsel %vm281, %v263, 0
    %v334 = vsel %vm281, %v264, 0
    %v337 = vsel %vm281, %v265, 0
    %v340 = vsel %vm281, %v266, 0
    %v343 = vsel %vm281, %v267, 0
    %v346 = vsel %vm281, %v268, 0
    %v349 = vsel %vm281, %v269, 0
    %v352 = vsel %vm281, %v270, 0
    %v355 = vsel %vm281, %v271, 0
    %v358 = vsel %vm281, %v272, 0
    %v361 = vsel %vm281, %v273, 0
    %v364 = vsel %vm281, %v274, 0
    %v367 = vsel %vm281, %v275, 0
    %v370 = vsel %vm281, %v276, 0
    %v373 = vsel %vm281, %v277, 0
    %v376 = vsel %vm281, %v278, 0
    %v379 = vsel %vm281, %v279, 0
    %381 = vmatprep.subr.mxu0 0.0
    %382 = vmatpush1.xpose.msra.mxu0 %v286
    %383 = vmatprep.subr.mxu0 0.0
    %384 = vmatpush1.xpose.msra.mxu0 %v289
    %385 = vmatprep.subr.mxu0 0.0
    %386 = vmatpush1.xpose.msra.mxu0 %v292
    %387 = vmatprep.subr.mxu0 0.0
    %388 = vmatpush1.xpose.msra.mxu0 %v295
    %389 = vmatprep.subr.mxu0 0.0
    %390 = vmatpush1.xpose.msra.mxu0 %v298
    %391 = vmatprep.subr.mxu0 0.0
    %392 = vmatpush1.xpose.msra.mxu0 %v301
    %393 = vmatprep.subr.mxu0 0.0
    %394 = vmatpush1.xpose.msra.mxu0 %v304
    %395 = vmatprep.subr.mxu0 0.0
    %396 = vmatpush1.xpose.msra.mxu0 %v307
    %397 = vmatprep.subr.mxu0 0.0
    %398 = vmatpush1.xpose.msra.mxu0 %v310
    %399 = vmatprep.subr.mxu0 0.0
    %400 = vmatpush1.xpose.msra.mxu0 %v313
    %401 = vmatprep.subr.mxu0 0.0
    %402 = vmatpush1.xpose.msra.mxu0 %v316
    %403 = vmatprep.subr.mxu0 0.0
    %404 = vmatpush1.xpose.msra.mxu0 %v319
    %405 = vmatprep.subr.mxu0 0.0
    %406 = vmatpush1.xpose.msra.mxu0 %v322
    %407 = vmatprep.subr.mxu0 0.0
    %408 = vmatpush1.xpose.msra.mxu0 %v325
    %409 = vmatprep.subr.mxu0 0.0
    %410 = vmatpush1.xpose.msra.mxu0 %v328
    %411 = vmatprep.subr.mxu0 0.0
    %412 = vmatpush1.xpose.msra.mxu0 %v331
    %413 = vmatprep.subr.mxu0 0.0
    %414 = vmatpush1.xpose.msra.mxu0 %v334
    %415 = vmatprep.subr.mxu0 0.0
    %416 = vmatpush1.xpose.msra.mxu0 %v337
    %417 = vmatprep.subr.mxu0 0.0
    %418 = vmatpush1.xpose.msra.mxu0 %v340
    %419 = vmatprep.subr.mxu0 0.0
    %420 = vmatpush1.xpose.msra.mxu0 %v343
    %421 = vmatprep.subr.mxu0 0.0
    %422 = vmatpush1.xpose.msra.mxu0 %v346
    %423 = vmatprep.subr.mxu0 0.0
    %424 = vmatpush1.xpose.msra.mxu0 %v349
    %425 = vmatprep.subr.mxu0 0.0
    %426 = vmatpush1.xpose.msra.mxu0 %v352
    %427 = vmatprep.subr.mxu0 0.0
    %428 = vmatpush1.xpose.msra.mxu0 %v355
    %429 = vmatprep.subr.mxu0 0.0
    %430 = vmatpush1.xpose.msra.mxu0 %v358
    %431 = vmatprep.subr.mxu0 0.0
    %432 = vmatpush1.xpose.msra.mxu0 %v361
    %433 = vmatprep.subr.mxu0 0.0
    %434 = vmatpush1.xpose.msra.mxu0 %v364
    %435 = vmatprep.subr.mxu0 0.0
    %436 = vmatpush1.xpose.msra.mxu0 %v367
    %437 = vmatprep.subr.mxu0 0.0
    %438 = vmatpush1.xpose.msra.mxu0 %v370
    %439 = vmatprep.subr.mxu0 0.0
    %440 = vmatpush1.xpose.msra.mxu0 %v373
    %441 = vmatprep.subr.mxu0 0.0
    %442 = vmatpush1.xpose.msra.mxu0 %v376
    %443 = vmatprep.subr.mxu0 0.0
    %444 = vmatpush1.xpose.msra.mxu0 %v379
    %445 = vmatprep.mubr.f32.mxu0 0.0
    %446 = vmatmul.mubr.f32.gmra.mrb[0].mxu0 %v283
    %v447 = vpop.f32.mrb[0].mxu0
    %v448 = vadd.f32 0.0, %v447
    %v449 = vpop.f32.mrb[0].mxu0
    %v450 = vadd.f32 0.0, %v449
    %451 = vdwg.mxu0
    %v453 = vrot.slane %v448, 4
    %v456 = vrot.slane %v450, 4
    %v458 = vsel %vm246, %v448, %v450
    %v459 = vsel %vm246, %v453, %v456
    %v460 = vld [vmem:[%s0] sm:$0xf]
    %v461 = vrot.slane %v460, 4
    %v462 = vsel %vm246, %v460, %v461
    %v463 = vlaneseq
    %v464 = vshrl.u32 %v463, 7
    %v465 = vsub.s32 0, %v464
    %v466 = vrot.slane %v462, %v465
    %468 = vbcast.lane.b32.xlu0 %v466, 256
    %v469 = vpop.permute.xlu0 %468
    %v470 = vlaneseq
    %v471 = vshrl.u32 %v470, 7
    %v472 = vsub.s32 1, %v471
    %v473 = vrot.slane %v462, %v472
    %475 = vbcast.lane.b32.xlu0 %v473, 256
    %v476 = vpop.permute.xlu0 %475
    %v477 = vlaneseq
    %v478 = vshrl.u32 %v477, 7
    %v479 = vsub.s32 2, %v478
    %v480 = vrot.slane %v462, %v479
    %482 = vbcast.lane.b32.xlu0 %v480, 256
    %v483 = vpop.permute.xlu0 %482
    %v484 = vlaneseq
    %v485 = vshrl.u32 %v484, 7
    %v486 = vsub.s32 3, %v485
    %v487 = vrot.slane %v462, %v486
    %489 = vbcast.lane.b32.xlu0 %v487, 256
    %v490 = vpop.permute.xlu0 %489
    %v491 = vlaneseq
    %v492 = vshrl.u32 %v491, 7
    %v493 = vsub.s32 4, %v492
    %v494 = vrot.slane %v462, %v493
    %496 = vbcast.lane.b32.xlu0 %v494, 256
    %v497 = vpop.permute.xlu0 %496
    %v498 = vlaneseq
    %v499 = vshrl.u32 %v498, 7
    %v500 = vsub.s32 5, %v499
    %v501 = vrot.slane %v462, %v500
    %503 = vbcast.lane.b32.xlu0 %v501, 256
    %v504 = vpop.permute.xlu0 %503
    %v505 = vlaneseq
    %v506 = vshrl.u32 %v505, 7
    %v507 = vsub.s32 6, %v506
    %v508 = vrot.slane %v462, %v507
    %510 = vbcast.lane.b32.xlu0 %v508, 256
    %v511 = vpop.permute.xlu0 %510
    %v512 = vlaneseq
    %v513 = vshrl.u32 %v512, 7
    %v514 = vsub.s32 7, %v513
    %v515 = vrot.slane %v462, %v514
    %517 = vbcast.lane.b32.xlu0 %v515, 256
    %v518 = vpop.permute.xlu0 %517
    %vm519 = vcmp.eq.s32.totalorder %v235, %v469
    %vm520 = vcmp.eq.s32.totalorder %v235, %v476
    %vm521 = vcmp.eq.s32.totalorder %v235, %v483
    %vm522 = vcmp.eq.s32.totalorder %v235, %v490
    %vm523 = vcmp.eq.s32.totalorder %v235, %v497
    %vm524 = vcmp.eq.s32.totalorder %v235, %v504
    %vm525 = vcmp.eq.s32.totalorder %v235, %v511
    %vm526 = vcmp.eq.s32.totalorder %v235, %v518
    %v527 = vsel %vm519, 1, 0
    %v528 = vsel %vm520, 1, 0
    %v529 = vsel %vm521, 1, 0
    %v530 = vsel %vm522, 1, 0
    %v531 = vsel %vm523, 1, 0
    %v532 = vsel %vm524, 1, 0
    %v533 = vsel %vm525, 1, 0
    %v534 = vsel %vm526, 1, 0
    %v535 = vcvt.s32.f32 %v527
    %v536 = vcvt.s32.f32 %v528
    %v537 = vcvt.s32.f32 %v529
    %v538 = vcvt.s32.f32 %v530
    %v539 = vcvt.s32.f32 %v531
    %v540 = vcvt.s32.f32 %v532
    %v541 = vcvt.s32.f32 %v533
    %v542 = vcvt.s32.f32 %v534
    %v545 = vcombine.high %v458, %v458
    %v547 = vunpack.c.l.s4 1966171168
    %v548 = vunpack.c.0.s8 %v547
    %v549 = vlaneseq
    %v550 = vshrl.u32 %v549, 7
    %v551 = vsub.s32 %v548, %v550
    %v552 = vrot.slane %v458, %v551
    %v554 = vunpack.c.l.s4 1966171168
    %v555 = vunpack.c.0.s8 %v554
    %v556 = vlaneseq
    %v557 = vshrl.u32 %v556, 7
    %v558 = vsub.s32 %v555, %v557
    %v559 = vrot.slane %v545, %v558
    %v560 = vcombine.high %v552, %v552
    %v561 = vcombine.high %v559, %v559
    %v563 = vunpack.c.l.s4 1966171168
    %v564 = vunpack.c.0.s8 %v563
    %v565 = vlaneseq
    %v566 = vshrl.u32 %v565, 7
    %v567 = vsub.s32 %v564, %v566
    %v568 = vrot.slane %v552, %v567
    %v570 = vunpack.c.l.s4 1966171168
    %v571 = vunpack.c.0.s8 %v570
    %v572 = vlaneseq
    %v573 = vshrl.u32 %v572, 7
    %v574 = vsub.s32 %v571, %v573
    %v575 = vrot.slane %v559, %v574
    %v577 = vunpack.c.l.s4 1966171168
    %v578 = vunpack.c.0.s8 %v577
    %v579 = vlaneseq
    %v580 = vshrl.u32 %v579, 7
    %v581 = vsub.s32 %v578, %v580
    %v582 = vrot.slane %v560, %v581
    %v584 = vunpack.c.l.s4 1966171168
    %v585 = vunpack.c.0.s8 %v584
    %v586 = vlaneseq
    %v587 = vshrl.u32 %v586, 7
    %v588 = vsub.s32 %v585, %v587
    %v589 = vrot.slane %v561, %v588
    %v590 = vcombine.high %v568, %v568
    %v591 = vcombine.high %v575, %v575
    %v592 = vcombine.high %v582, %v582
    %v593 = vcombine.high %v589, %v589
    %v594 = vcombine.high %v459, %v459
    %v596 = vunpack.c.l.s4 1966171168
    %v597 = vunpack.c.0.s8 %v596
    %v598 = vlaneseq
    %v599 = vshrl.u32 %v598, 7
    %v600 = vsub.s32 %v597, %v599
    %v601 = vrot.slane %v459, %v600
    %v603 = vunpack.c.l.s4 1966171168
    %v604 = vunpack.c.0.s8 %v603
    %v605 = vlaneseq
    %v606 = vshrl.u32 %v605, 7
    %v607 = vsub.s32 %v604, %v606
    %v608 = vrot.slane %v594, %v607
    %v609 = vcombine.high %v601, %v601
    %v610 = vcombine.high %v608, %v608
    %v612 = vunpack.c.l.s4 1966171168
    %v613 = vunpack.c.0.s8 %v612
    %v614 = vlaneseq
    %v615 = vshrl.u32 %v614, 7
    %v616 = vsub.s32 %v613, %v615
    %v617 = vrot.slane %v601, %v616
    %v619 = vunpack.c.l.s4 1966171168
    %v620 = vunpack.c.0.s8 %v619
    %v621 = vlaneseq
    %v622 = vshrl.u32 %v621, 7
    %v623 = vsub.s32 %v620, %v622
    %v624 = vrot.slane %v608, %v623
    %v626 = vunpack.c.l.s4 1966171168
    %v627 = vunpack.c.0.s8 %v626
    %v628 = vlaneseq
    %v629 = vshrl.u32 %v628, 7
    %v630 = vsub.s32 %v627, %v629
    %v631 = vrot.slane %v609, %v630
    %v633 = vunpack.c.l.s4 1966171168
    %v634 = vunpack.c.0.s8 %v633
    %v635 = vlaneseq
    %v636 = vshrl.u32 %v635, 7
    %v637 = vsub.s32 %v634, %v636
    %v638 = vrot.slane %v610, %v637
    %v639 = vcombine.high %v617, %v617
    %v640 = vcombine.high %v624, %v624
    %v641 = vcombine.high %v631, %v631
    %v642 = vcombine.high %v638, %v638
    %v643 = vlaneseq
    %v644 = vshrl.u32 %v643, 7
    %v645 = vsub.s32 0, %v644
    %v646 = vrot.slane %v568, %v645
    %v647 = vlaneseq
    %v648 = vshrl.u32 %v647, 7
    %v649 = vsub.s32 0, %v648
    %v650 = vrot.slane %v582, %v649
    %v651 = vlaneseq
    %v652 = vshrl.u32 %v651, 7
    %v653 = vsub.s32 0, %v652
    %v654 = vrot.slane %v590, %v653
    %v655 = vlaneseq
    %v656 = vshrl.u32 %v655, 7
    %v657 = vsub.s32 0, %v656
    %v658 = vrot.slane %v592, %v657
    %v659 = vlaneseq
    %v660 = vshrl.u32 %v659, 7
    %v661 = vsub.s32 0, %v660
    %v662 = vrot.slane %v575, %v661
    %v663 = vlaneseq
    %v664 = vshrl.u32 %v663, 7
    %v665 = vsub.s32 0, %v664
    %v666 = vrot.slane %v589, %v665
    %v667 = vlaneseq
    %v668 = vshrl.u32 %v667, 7
    %v669 = vsub.s32 0, %v668
    %v670 = vrot.slane %v591, %v669
    %v671 = vlaneseq
    %v672 = vshrl.u32 %v671, 7
    %v673 = vsub.s32 0, %v672
    %v674 = vrot.slane %v593, %v673
    %v675 = vlaneseq
    %v676 = vshrl.u32 %v675, 7
    %v677 = vsub.s32 0, %v676
    %v678 = vrot.slane %v617, %v677
    %v679 = vlaneseq
    %v680 = vshrl.u32 %v679, 7
    %v681 = vsub.s32 0, %v680
    %v682 = vrot.slane %v631, %v681
    %v683 = vlaneseq
    %v684 = vshrl.u32 %v683, 7
    %v685 = vsub.s32 0, %v684
    %v686 = vrot.slane %v639, %v685
    %v687 = vlaneseq
    %v688 = vshrl.u32 %v687, 7
    %v689 = vsub.s32 0, %v688
    %v690 = vrot.slane %v641, %v689
    %v691 = vlaneseq
    %v692 = vshrl.u32 %v691, 7
    %v693 = vsub.s32 0, %v692
    %v694 = vrot.slane %v624, %v693
    %v695 = vlaneseq
    %v696 = vshrl.u32 %v695, 7
    %v697 = vsub.s32 0, %v696
    %v698 = vrot.slane %v638, %v697
    %v699 = vlaneseq
    %v700 = vshrl.u32 %v699, 7
    %v701 = vsub.s32 0, %v700
    %v702 = vrot.slane %v640, %v701
    %v703 = vlaneseq
    %v704 = vshrl.u32 %v703, 7
    %v705 = vsub.s32 0, %v704
    %v706 = vrot.slane %v642, %v705
    %v723 = vmul.f32 %v535, %v646
    %v724 = vmul.f32 %v536, %v650
    %v725 = vmul.f32 %v537, %v654
    %v726 = vmul.f32 %v538, %v658
    %v727 = vmul.f32 %v539, %v662
    %v728 = vmul.f32 %v540, %v666
    %v729 = vmul.f32 %v541, %v670
    %v730 = vmul.f32 %v542, %v674
    %v731 = vmul.f32 %v535, %v678
    %v732 = vmul.f32 %v536, %v682
    %v733 = vmul.f32 %v537, %v686
    %v734 = vmul.f32 %v538, %v690
    %v735 = vmul.f32 %v539, %v694
    %v736 = vmul.f32 %v540, %v698
    %v737 = vmul.f32 %v541, %v702
    %v738 = vmul.f32 %v542, %v706
    %739 = vadd.xlane.f32.xlu0 %v723
    %v740 = vpop.xlane.xlu0 %739
    %741 = vadd.xlane.f32.xlu0 %v724
    %v742 = vpop.xlane.xlu0 %741
    %743 = vadd.xlane.f32.xlu0 %v725
    %v744 = vpop.xlane.xlu0 %743
    %745 = vadd.xlane.f32.xlu0 %v726
    %v746 = vpop.xlane.xlu0 %745
    %747 = vadd.xlane.f32.xlu0 %v727
    %v748 = vpop.xlane.xlu0 %747
    %749 = vadd.xlane.f32.xlu0 %v728
    %v750 = vpop.xlane.xlu0 %749
    %751 = vadd.xlane.f32.xlu0 %v729
    %v752 = vpop.xlane.xlu0 %751
    %753 = vadd.xlane.f32.xlu0 %v730
    %v754 = vpop.xlane.xlu0 %753
    %755 = vadd.xlane.f32.xlu0 %v731
    %v756 = vpop.xlane.xlu0 %755
    %757 = vadd.xlane.f32.xlu0 %v732
    %v758 = vpop.xlane.xlu0 %757
    %759 = vadd.xlane.f32.xlu0 %v733
    %v760 = vpop.xlane.xlu0 %759
    %761 = vadd.xlane.f32.xlu0 %v734
    %v762 = vpop.xlane.xlu0 %761
    %763 = vadd.xlane.f32.xlu0 %v735
    %v764 = vpop.xlane.xlu0 %763
    %765 = vadd.xlane.f32.xlu0 %v736
    %v766 = vpop.xlane.xlu0 %765
    %767 = vadd.xlane.f32.xlu0 %v737
    %v768 = vpop.xlane.xlu0 %767
    %769 = vadd.xlane.f32.xlu0 %v738
    %v770 = vpop.xlane.xlu0 %769
    %vm771 = vcmp.lt.s32.totalorder %v235, 3
    %v772 = vsel %vm771, 1, 0
    %v773 = vcvt.s32.f32 %v772
    %v782 = vlaneseq
    %v783 = vshrl.u32 %v782, 7
    %v784 = vsub.s32 %v235, %v783
    %v785 = vrot.slane %v740, %v784
    %v786 = vlaneseq
    %v787 = vshrl.u32 %v786, 7
    %v788 = vsub.s32 %v235, %v787
    %v789 = vrot.slane %v742, %v788
    %v790 = vlaneseq
    %v791 = vshrl.u32 %v790, 7
    %v792 = vsub.s32 %v235, %v791
    %v793 = vrot.slane %v744, %v792
    %v794 = vlaneseq
    %v795 = vshrl.u32 %v794, 7
    %v796 = vsub.s32 %v235, %v795
    %v797 = vrot.slane %v746, %v796
    %v798 = vlaneseq
    %v799 = vshrl.u32 %v798, 7
    %v800 = vsub.s32 %v235, %v799
    %v801 = vrot.slane %v748, %v800
    %v802 = vlaneseq
    %v803 = vshrl.u32 %v802, 7
    %v804 = vsub.s32 %v235, %v803
    %v805 = vrot.slane %v750, %v804
    %v806 = vlaneseq
    %v807 = vshrl.u32 %v806, 7
    %v808 = vsub.s32 %v235, %v807
    %v809 = vrot.slane %v752, %v808
    %v810 = vlaneseq
    %v811 = vshrl.u32 %v810, 7
    %v812 = vsub.s32 %v235, %v811
    %v813 = vrot.slane %v754, %v812
    %vm814 = vcmask 1041409
    %v815 = vsel %vm814, %v789, %v785
    %vm816 = vcmask 1042434
    %v817 = vsel %vm816, %v793, %v815
    %vm818 = vcmask 1043459
    %v819 = vsel %vm818, %v797, %v817
    %vm820 = vcmask 1044484
    %v821 = vsel %vm820, %v801, %v819
    %vm822 = vcmask 1045509
    %v823 = vsel %vm822, %v805, %v821
    %vm824 = vcmask 1046534
    %v825 = vsel %vm824, %v809, %v823
    %vm826 = vcmask 1047559
    %v827 = vsel %vm826, %v813, %v825
    %vm829 = vcmask 64520
    %v830 = vsel %vm829, %v827, -inf
    %831 = vmax.xlane.f32.xlu0 %v830
    %v832 = vpop.xlane.xlu0 %831
    %v834 = vlaneseq
    %v835 = vshrl.u32 %v834, 7
    %v836 = vsub.s32 0, %v835
    %v837 = vrot.slane %v832, %v836
    %v838 = vlaneseq
    %v839 = vshrl.u32 %v838, 7
    %v840 = vsub.s32 1, %v839
    %v841 = vrot.slane %v832, %v840
    %v842 = vlaneseq
    %v843 = vshrl.u32 %v842, 7
    %v844 = vsub.s32 2, %v843
    %v845 = vrot.slane %v832, %v844
    %v846 = vlaneseq
    %v847 = vshrl.u32 %v846, 7
    %v848 = vsub.s32 3, %v847
    %v849 = vrot.slane %v832, %v848
    %v850 = vlaneseq
    %v851 = vshrl.u32 %v850, 7
    %v852 = vsub.s32 4, %v851
    %v853 = vrot.slane %v832, %v852
    %v854 = vlaneseq
    %v855 = vshrl.u32 %v854, 7
    %v856 = vsub.s32 5, %v855
    %v857 = vrot.slane %v832, %v856
    %v858 = vlaneseq
    %v859 = vshrl.u32 %v858, 7
    %v860 = vsub.s32 6, %v859
    %v861 = vrot.slane %v832, %v860
    %v862 = vlaneseq
    %v863 = vshrl.u32 %v862, 7
    %v864 = vsub.s32 7, %v863
    %v865 = vrot.slane %v832, %v864
    %v874 = vsub.f32 %v740, %v837
    %v875 = vsub.f32 %v742, %v841
    %v876 = vsub.f32 %v744, %v845
    %v877 = vsub.f32 %v746, %v849
    %v878 = vsub.f32 %v748, %v853
    %v879 = vsub.f32 %v750, %v857
    %v880 = vsub.f32 %v752, %v861
    %v881 = vsub.f32 %v754, %v865
    %v882 = vmul.f32 %v874, 1.442695
    %v883 = vpow.pop %v882
    %v884 = vmul.f32 %v875, 1.442695
    %v885 = vpow.pop %v884
    %v886 = vmul.f32 %v876, 1.442695
    %v887 = vpow.pop %v886
    %v888 = vmul.f32 %v877, 1.442695
    %v889 = vpow.pop %v888
    %v890 = vmul.f32 %v878, 1.442695
    %v891 = vpow.pop %v890
    %v892 = vmul.f32 %v879, 1.442695
    %v893 = vpow.pop %v892
    %v894 = vmul.f32 %v880, 1.442695
    %v895 = vpow.pop %v894
    %v896 = vmul.f32 %v881, 1.442695
    %v897 = vpow.pop %v896
    %906 = vset.pattern.permute.xlu0 0
    %907 = vperm.xlu0 %906, %v883
    %v908 = vpop.permute.xlu0 %907
    %909 = vset.pattern.permute.xlu0 0
    %910 = vperm.xlu0 %909, %v885
    %v911 = vpop.permute.xlu0 %910
    %912 = vset.pattern.permute.xlu0 0
    %913 = vperm.xlu0 %912, %v887
    %v914 = vpop.permute.xlu0 %913
    %915 = vset.pattern.permute.xlu0 0
    %916 = vperm.xlu0 %915, %v889
    %v917 = vpop.permute.xlu0 %916
    %918 = vset.pattern.permute.xlu0 0
    %919 = vperm.xlu0 %918, %v891
    %v920 = vpop.permute.xlu0 %919
    %921 = vset.pattern.permute.xlu0 0
    %922 = vperm.xlu0 %921, %v893
    %v923 = vpop.permute.xlu0 %922
    %924 = vset.pattern.permute.xlu0 0
    %925 = vperm.xlu0 %924, %v895
    %v926 = vpop.permute.xlu0 %925
    %927 = vset.pattern.permute.xlu0 0
    %928 = vperm.xlu0 %927, %v897
    %v929 = vpop.permute.xlu0 %928
    %v930 = vadd.s32 %v235, 1
    %v931 = vlaneseq
    %v932 = vshrl.u32 %v931, 7
    %v933 = vsub.s32 %v930, %v932
    %v934 = vrot.slane %v908, %v933
    %v935 = vlaneseq
    %v936 = vshrl.u32 %v935, 7
    %v937 = vsub.s32 %v930, %v936
    %v938 = vrot.slane %v911, %v937
    %v939 = vlaneseq
    %v940 = vshrl.u32 %v939, 7
    %v941 = vsub.s32 %v930, %v940
    %v942 = vrot.slane %v914, %v941
    %v943 = vlaneseq
    %v944 = vshrl.u32 %v943, 7
    %v945 = vsub.s32 %v930, %v944
    %v946 = vrot.slane %v917, %v945
    %v947 = vlaneseq
    %v948 = vshrl.u32 %v947, 7
    %v949 = vsub.s32 %v930, %v948
    %v950 = vrot.slane %v920, %v949
    %v951 = vlaneseq
    %v952 = vshrl.u32 %v951, 7
    %v953 = vsub.s32 %v930, %v952
    %v954 = vrot.slane %v923, %v953
    %v955 = vlaneseq
    %v956 = vshrl.u32 %v955, 7
    %v957 = vsub.s32 %v930, %v956
    %v958 = vrot.slane %v926, %v957
    %v959 = vlaneseq
    %v960 = vshrl.u32 %v959, 7
    %v961 = vsub.s32 %v930, %v960
    %v962 = vrot.slane %v929, %v961
    %v963 = vsel %vm814, %v938, %v934
    %v964 = vsel %vm816, %v942, %v963
    %v965 = vsel %vm818, %v946, %v964
    %v966 = vsel %vm820, %v950, %v965
    %v967 = vsel %vm822, %v954, %v966
    %v968 = vsel %vm824, %v958, %v967
    %v969 = vsel %vm826, %v962, %v968
    %vm971 = vcmask 56320
    %v972 = vsel %vm971, %v969, 0.0
    %973 = vadd.xlane.f32.xlu0 %v972
    %v974 = vpop.xlane.xlu0 %973
    %v975 = vlog2.pop %v974
    %v976 = vmul.f32 %v975, 0.6931472
    %v978 = vlaneseq
    %v979 = vshrl.u32 %v978, 7
    %v980 = vsub.s32 0, %v979
    %v981 = vrot.slane %v976, %v980
    %v982 = vlaneseq
    %v983 = vshrl.u32 %v982, 7
    %v984 = vsub.s32 1, %v983
    %v985 = vrot.slane %v976, %v984
    %v986 = vlaneseq
    %v987 = vshrl.u32 %v986, 7
    %v988 = vsub.s32 2, %v987
    %v989 = vrot.slane %v976, %v988
    %v990 = vlaneseq
    %v991 = vshrl.u32 %v990, 7
    %v992 = vsub.s32 3, %v991
    %v993 = vrot.slane %v976, %v992
    %v994 = vlaneseq
    %v995 = vshrl.u32 %v994, 7
    %v996 = vsub.s32 4, %v995
    %v997 = vrot.slane %v976, %v996
    %v998 = vlaneseq
    %v999 = vshrl.u32 %v998, 7
    %v1000 = vsub.s32 5, %v999
    %v1001 = vrot.slane %v976, %v1000
    %v1002 = vlaneseq
    %v1003 = vshrl.u32 %v1002, 7
    %v1004 = vsub.s32 6, %v1003
    %v1005 = vrot.slane %v976, %v1004
    %v1006 = vlaneseq
    %v1007 = vshrl.u32 %v1006, 7
    %v1008 = vsub.s32 7, %v1007
    %v1009 = vrot.slane %v976, %v1008
    %v1018 = vsub.f32 %v874, %v981
    %v1019 = vsub.f32 %v875, %v985
    %v1020 = vsub.f32 %v876, %v989
    %v1021 = vsub.f32 %v877, %v993
    %v1022 = vsub.f32 %v878, %v997
    %v1023 = vsub.f32 %v879, %v1001
    %v1024 = vsub.f32 %v880, %v1005
    %v1025 = vsub.f32 %v881, %v1009
    %1034 = vset.pattern.permute.xlu0 0
    %1035 = vperm.xlu0 %1034, %v1018
    %v1036 = vpop.permute.xlu0 %1035
    %1037 = vset.pattern.permute.xlu0 0
    %1038 = vperm.xlu0 %1037, %v1019
    %v1039 = vpop.permute.xlu0 %1038
    %1040 = vset.pattern.permute.xlu0 0
    %1041 = vperm.xlu0 %1040, %v1020
    %v1042 = vpop.permute.xlu0 %1041
    %1043 = vset.pattern.permute.xlu0 0
    %1044 = vperm.xlu0 %1043, %v1021
    %v1045 = vpop.permute.xlu0 %1044
    %1046 = vset.pattern.permute.xlu0 0
    %1047 = vperm.xlu0 %1046, %v1022
    %v1048 = vpop.permute.xlu0 %1047
    %1049 = vset.pattern.permute.xlu0 0
    %1050 = vperm.xlu0 %1049, %v1023
    %v1051 = vpop.permute.xlu0 %1050
    %1052 = vset.pattern.permute.xlu0 0
    %1053 = vperm.xlu0 %1052, %v1024
    %v1054 = vpop.permute.xlu0 %1053
    %1055 = vset.pattern.permute.xlu0 0
    %1056 = vperm.xlu0 %1055, %v1025
    %v1057 = vpop.permute.xlu0 %1056
    %v1058 = vlaneseq
    %v1059 = vshrl.u32 %v1058, 7
    %v1060 = vsub.s32 %v235, %v1059
    %v1061 = vrot.slane %v1036, %v1060
    %v1062 = vlaneseq
    %v1063 = vshrl.u32 %v1062, 7
    %v1064 = vsub.s32 %v235, %v1063
    %v1065 = vrot.slane %v1039, %v1064
    %v1066 = vlaneseq
    %v1067 = vshrl.u32 %v1066, 7
    %v1068 = vsub.s32 %v235, %v1067
    %v1069 = vrot.slane %v1042, %v1068
    %v1070 = vlaneseq
    %v1071 = vshrl.u32 %v1070, 7
    %v1072 = vsub.s32 %v235, %v1071
    %v1073 = vrot.slane %v1045, %v1072
    %v1074 = vlaneseq
    %v1075 = vshrl.u32 %v1074, 7
    %v1076 = vsub.s32 %v235, %v1075
    %v1077 = vrot.slane %v1048, %v1076
    %v1078 = vlaneseq
    %v1079 = vshrl.u32 %v1078, 7
    %v1080 = vsub.s32 %v235, %v1079
    %v1081 = vrot.slane %v1051, %v1080
    %v1082 = vlaneseq
    %v1083 = vshrl.u32 %v1082, 7
    %v1084 = vsub.s32 %v235, %v1083
    %v1085 = vrot.slane %v1054, %v1084
    %v1086 = vlaneseq
    %v1087 = vshrl.u32 %v1086, 7
    %v1088 = vsub.s32 %v235, %v1087
    %v1089 = vrot.slane %v1057, %v1088
    %v1090 = vsel %vm814, %v1065, %v1061
    %v1091 = vsel %vm816, %v1069, %v1090
    %v1092 = vsel %vm818, %v1073, %v1091
    %v1093 = vsel %vm820, %v1077, %v1092
    %v1094 = vsel %vm822, %v1081, %v1093
    %v1095 = vsel %vm824, %v1085, %v1094
    %v1096 = vsel %vm826, %v1089, %v1095
    %v1098 = vmul.f32 %v773, %v1096
    %1100 = vrot.lane.b32.xlu0 %v1098, 127
    %v1101 = vpop.permute.xlu0 %1100
    %v1103 = vsel %vm971, %v1101, 0.0
    %1104 = vadd.xlane.f32.xlu0 %v1103
    %v1105 = vpop.xlane.xlu0 %1104
    %v1106 = vrot.slane %v1105, 4
    %v1107 = vadd.f32 %v1105, %v1106
    %v1108 = vrot.slane %v1107, 2
    %v1109 = vadd.f32 %v1107, %v1108
    %v1110 = vrot.slane %v1109, 1
    %v1111 = vadd.f32 %v1109, %v1110
    %s1112 = vtos %v1111
    %s1113 = ssub.f32 0.0, %s1112
    %v1114 = vrcp.pop 8.0
    %s1115 = vtos %v1114
    %s1116 = smul.f32 %s1113, %s1115
    %v1125 = vlaneseq
    %v1126 = vshrl.u32 %v1125, 7
    %v1127 = vsub.s32 %v235, %v1126
    %v1128 = vrot.slane %v756, %v1127
    %v1129 = vlaneseq
    %v1130 = vshrl.u32 %v1129, 7
    %v1131 = vsub.s32 %v235, %v1130
    %v1132 = vrot.slane %v758, %v1131
    %v1133 = vlaneseq
    %v1134 = vshrl.u32 %v1133, 7
    %v1135 = vsub.s32 %v235, %v1134
    %v1136 = vrot.slane %v760, %v1135
    %v1137 = vlaneseq
    %v1138 = vshrl.u32 %v1137, 7
    %v1139 = vsub.s32 %v235, %v1138
    %v1140 = vrot.slane %v762, %v1139
    %v1141 = vlaneseq
    %v1142 = vshrl.u32 %v1141, 7
    %v1143 = vsub.s32 %v235, %v1142
    %v1144 = vrot.slane %v764, %v1143
    %v1145 = vlaneseq
    %v1146 = vshrl.u32 %v1145, 7
    %v1147 = vsub.s32 %v235, %v1146
    %v1148 = vrot.slane %v766, %v1147
    %v1149 = vlaneseq
    %v1150 = vshrl.u32 %v1149, 7
    %v1151 = vsub.s32 %v235, %v1150
    %v1152 = vrot.slane %v768, %v1151
    %v1153 = vlaneseq
    %v1154 = vshrl.u32 %v1153, 7
    %v1155 = vsub.s32 %v235, %v1154
    %v1156 = vrot.slane %v770, %v1155
    %v1157 = vsel %vm814, %v1132, %v1128
    %v1158 = vsel %vm816, %v1136, %v1157
    %v1159 = vsel %vm818, %v1140, %v1158
    %v1160 = vsel %vm820, %v1144, %v1159
    %v1161 = vsel %vm822, %v1148, %v1160
    %v1162 = vsel %vm824, %v1152, %v1161
    %v1163 = vsel %vm826, %v1156, %v1162
    %vm1165 = vcmask 64512
    %v1166 = vsel %vm1165, %v1163, -inf
    %1167 = vmax.xlane.f32.xlu0 %v1166
    %v1168 = vpop.xlane.xlu0 %1167
    %v1170 = vlaneseq
    %v1171 = vshrl.u32 %v1170, 7
    %v1172 = vsub.s32 0, %v1171
    %v1173 = vrot.slane %v1168, %v1172
    %v1174 = vlaneseq
    %v1175 = vshrl.u32 %v1174, 7
    %v1176 = vsub.s32 1, %v1175
    %v1177 = vrot.slane %v1168, %v1176
    %v1178 = vlaneseq
    %v1179 = vshrl.u32 %v1178, 7
    %v1180 = vsub.s32 2, %v1179
    %v1181 = vrot.slane %v1168, %v1180
    %v1182 = vlaneseq
    %v1183 = vshrl.u32 %v1182, 7
    %v1184 = vsub.s32 3, %v1183
    %v1185 = vrot.slane %v1168, %v1184
    %v1186 = vlaneseq
    %v1187 = vshrl.u32 %v1186, 7
    %v1188 = vsub.s32 4, %v1187
    %v1189 = vrot.slane %v1168, %v1188
    %v1190 = vlaneseq
    %v1191 = vshrl.u32 %v1190, 7
    %v1192 = vsub.s32 5, %v1191
    %v1193 = vrot.slane %v1168, %v1192
    %v1194 = vlaneseq
    %v1195 = vshrl.u32 %v1194, 7
    %v1196 = vsub.s32 6, %v1195
    %v1197 = vrot.slane %v1168, %v1196
    %v1198 = vlaneseq
    %v1199 = vshrl.u32 %v1198, 7
    %v1200 = vsub.s32 7, %v1199
    %v1201 = vrot.slane %v1168, %v1200
    %v1210 = vsub.f32 %v756, %v1173
    %v1211 = vsub.f32 %v758, %v1177
    %v1212 = vsub.f32 %v760, %v1181
    %v1213 = vsub.f32 %v762, %v1185
    %v1214 = vsub.f32 %v764, %v1189
    %v1215 = vsub.f32 %v766, %v1193
    %v1216 = vsub.f32 %v768, %v1197
    %v1217 = vsub.f32 %v770, %v1201
    %v1218 = vmul.f32 %v1210, 1.442695
    %v1219 = vpow.pop %v1218
    %v1220 = vmul.f32 %v1211, 1.442695
    %v1221 = vpow.pop %v1220
    %v1222 = vmul.f32 %v1212, 1.442695
    %v1223 = vpow.pop %v1222
    %v1224 = vmul.f32 %v1213, 1.442695
    %v1225 = vpow.pop %v1224
    %v1226 = vmul.f32 %v1214, 1.442695
    %v1227 = vpow.pop %v1226
    %v1228 = vmul.f32 %v1215, 1.442695
    %v1229 = vpow.pop %v1228
    %v1230 = vmul.f32 %v1216, 1.442695
    %v1231 = vpow.pop %v1230
    %v1232 = vmul.f32 %v1217, 1.442695
    %v1233 = vpow.pop %v1232
    %1242 = vset.pattern.permute.xlu0 0
    %1243 = vperm.xlu0 %1242, %v1219
    %v1244 = vpop.permute.xlu0 %1243
    %1245 = vset.pattern.permute.xlu0 0
    %1246 = vperm.xlu0 %1245, %v1221
    %v1247 = vpop.permute.xlu0 %1246
    %1248 = vset.pattern.permute.xlu0 0
    %1249 = vperm.xlu0 %1248, %v1223
    %v1250 = vpop.permute.xlu0 %1249
    %1251 = vset.pattern.permute.xlu0 0
    %1252 = vperm.xlu0 %1251, %v1225
    %v1253 = vpop.permute.xlu0 %1252
    %1254 = vset.pattern.permute.xlu0 0
    %1255 = vperm.xlu0 %1254, %v1227
    %v1256 = vpop.permute.xlu0 %1255
    %1257 = vset.pattern.permute.xlu0 0
    %1258 = vperm.xlu0 %1257, %v1229
    %v1259 = vpop.permute.xlu0 %1258
    %1260 = vset.pattern.permute.xlu0 0
    %1261 = vperm.xlu0 %1260, %v1231
    %v1262 = vpop.permute.xlu0 %1261
    %1263 = vset.pattern.permute.xlu0 0
    %1264 = vperm.xlu0 %1263, %v1233
    %v1265 = vpop.permute.xlu0 %1264
    %v1266 = vlaneseq
    %v1267 = vshrl.u32 %v1266, 7
    %v1268 = vsub.s32 %v235, %v1267
    %v1269 = vrot.slane %v1244, %v1268
    %v1270 = vlaneseq
    %v1271 = vshrl.u32 %v1270, 7
    %v1272 = vsub.s32 %v235, %v1271
    %v1273 = vrot.slane %v1247, %v1272
    %v1274 = vlaneseq
    %v1275 = vshrl.u32 %v1274, 7
    %v1276 = vsub.s32 %v235, %v1275
    %v1277 = vrot.slane %v1250, %v1276
    %v1278 = vlaneseq
    %v1279 = vshrl.u32 %v1278, 7
    %v1280 = vsub.s32 %v235, %v1279
    %v1281 = vrot.slane %v1253, %v1280
    %v1282 = vlaneseq
    %v1283 = vshrl.u32 %v1282, 7
    %v1284 = vsub.s32 %v235, %v1283
    %v1285 = vrot.slane %v1256, %v1284
    %v1286 = vlaneseq
    %v1287 = vshrl.u32 %v1286, 7
    %v1288 = vsub.s32 %v235, %v1287
    %v1289 = vrot.slane %v1259, %v1288
    %v1290 = vlaneseq
    %v1291 = vshrl.u32 %v1290, 7
    %v1292 = vsub.s32 %v235, %v1291
    %v1293 = vrot.slane %v1262, %v1292
    %v1294 = vlaneseq
    %v1295 = vshrl.u32 %v1294, 7
    %v1296 = vsub.s32 %v235, %v1295
    %v1297 = vrot.slane %v1265, %v1296
    %v1298 = vsel %vm814, %v1273, %v1269
    %v1299 = vsel %vm816, %v1277, %v1298
    %v1300 = vsel %vm818, %v1281, %v1299
    %v1301 = vsel %vm820, %v1285, %v1300
    %v1302 = vsel %vm822, %v1289, %v1301
    %v1303 = vsel %vm824, %v1293, %v1302
    %v1304 = vsel %vm826, %v1297, %v1303
    %v1306 = vsel %vm1165, %v1304, 0.0
    %1307 = vadd.xlane.f32.xlu0 %v1306
    %v1308 = vpop.xlane.xlu0 %1307
    %v1309 = vlog2.pop %v1308
    %v1310 = vmul.f32 %v1309, 0.6931472
    %v1312 = vlaneseq
    %v1313 = vshrl.u32 %v1312, 7
    %v1314 = vsub.s32 0, %v1313
    %v1315 = vrot.slane %v1310, %v1314
    %v1316 = vlaneseq
    %v1317 = vshrl.u32 %v1316, 7
    %v1318 = vsub.s32 1, %v1317
    %v1319 = vrot.slane %v1310, %v1318
    %v1320 = vlaneseq
    %v1321 = vshrl.u32 %v1320, 7
    %v1322 = vsub.s32 2, %v1321
    %v1323 = vrot.slane %v1310, %v1322
    %v1324 = vlaneseq
    %v1325 = vshrl.u32 %v1324, 7
    %v1326 = vsub.s32 3, %v1325
    %v1327 = vrot.slane %v1310, %v1326
    %v1328 = vlaneseq
    %v1329 = vshrl.u32 %v1328, 7
    %v1330 = vsub.s32 4, %v1329
    %v1331 = vrot.slane %v1310, %v1330
    %v1332 = vlaneseq
    %v1333 = vshrl.u32 %v1332, 7
    %v1334 = vsub.s32 5, %v1333
    %v1335 = vrot.slane %v1310, %v1334
    %v1336 = vlaneseq
    %v1337 = vshrl.u32 %v1336, 7
    %v1338 = vsub.s32 6, %v1337
    %v1339 = vrot.slane %v1310, %v1338
    %v1340 = vlaneseq
    %v1341 = vshrl.u32 %v1340, 7
    %v1342 = vsub.s32 7, %v1341
    %v1343 = vrot.slane %v1310, %v1342
    %v1352 = vsub.f32 %v1210, %v1315
    %v1353 = vsub.f32 %v1211, %v1319
    %v1354 = vsub.f32 %v1212, %v1323
    %v1355 = vsub.f32 %v1213, %v1327
    %v1356 = vsub.f32 %v1214, %v1331
    %v1357 = vsub.f32 %v1215, %v1335
    %v1358 = vsub.f32 %v1216, %v1339
    %v1359 = vsub.f32 %v1217, %v1343
    %1368 = vset.pattern.permute.xlu0 0
    %1369 = vperm.xlu0 %1368, %v1352
    %v1370 = vpop.permute.xlu0 %1369
    %1371 = vset.pattern.permute.xlu0 0
    %1372 = vperm.xlu0 %1371, %v1353
    %v1373 = vpop.permute.xlu0 %1372
    %1374 = vset.pattern.permute.xlu0 0
    %1375 = vperm.xlu0 %1374, %v1354
    %v1376 = vpop.permute.xlu0 %1375
    %1377 = vset.pattern.permute.xlu0 0
    %1378 = vperm.xlu0 %1377, %v1355
    %v1379 = vpop.permute.xlu0 %1378
    %1380 = vset.pattern.permute.xlu0 0
    %1381 = vperm.xlu0 %1380, %v1356
    %v1382 = vpop.permute.xlu0 %1381
    %1383 = vset.pattern.permute.xlu0 0
    %1384 = vperm.xlu0 %1383, %v1357
    %v1385 = vpop.permute.xlu0 %1384
    %1386 = vset.pattern.permute.xlu0 0
    %1387 = vperm.xlu0 %1386, %v1358
    %v1388 = vpop.permute.xlu0 %1387
    %1389 = vset.pattern.permute.xlu0 0
    %1390 = vperm.xlu0 %1389, %v1359
    %v1391 = vpop.permute.xlu0 %1390
    %v1392 = vlaneseq
    %v1393 = vshrl.u32 %v1392, 7
    %v1394 = vsub.s32 %v235, %v1393
    %v1395 = vrot.slane %v1370, %v1394
    %v1396 = vlaneseq
    %v1397 = vshrl.u32 %v1396, 7
    %v1398 = vsub.s32 %v235, %v1397
    %v1399 = vrot.slane %v1373, %v1398
    %v1400 = vlaneseq
    %v1401 = vshrl.u32 %v1400, 7
    %v1402 = vsub.s32 %v235, %v1401
    %v1403 = vrot.slane %v1376, %v1402
    %v1404 = vlaneseq
    %v1405 = vshrl.u32 %v1404, 7
    %v1406 = vsub.s32 %v235, %v1405
    %v1407 = vrot.slane %v1379, %v1406
    %v1408 = vlaneseq
    %v1409 = vshrl.u32 %v1408, 7
    %v1410 = vsub.s32 %v235, %v1409
    %v1411 = vrot.slane %v1382, %v1410
    %v1412 = vlaneseq
    %v1413 = vshrl.u32 %v1412, 7
    %v1414 = vsub.s32 %v235, %v1413
    %v1415 = vrot.slane %v1385, %v1414
    %v1416 = vlaneseq
    %v1417 = vshrl.u32 %v1416, 7
    %v1418 = vsub.s32 %v235, %v1417
    %v1419 = vrot.slane %v1388, %v1418
    %v1420 = vlaneseq
    %v1421 = vshrl.u32 %v1420, 7
    %v1422 = vsub.s32 %v235, %v1421
    %v1423 = vrot.slane %v1391, %v1422
    %v1424 = vsel %vm814, %v1399, %v1395
    %v1425 = vsel %vm816, %v1403, %v1424
    %v1426 = vsel %vm818, %v1407, %v1425
    %v1427 = vsel %vm820, %v1411, %v1426
    %v1428 = vsel %vm822, %v1415, %v1427
    %v1429 = vsel %vm824, %v1419, %v1428
    %v1430 = vsel %vm826, %v1423, %v1429
    %v1432 = vmul.f32 %v773, %v1430
    %v1433 = vsel %vm1165, %v1432, 0.0
    %1434 = vadd.xlane.f32.xlu0 %v1433
    %v1435 = vpop.xlane.xlu0 %1434
    %v1436 = vrot.slane %v1435, 4
    %v1437 = vadd.f32 %v1435, %v1436
    %v1438 = vrot.slane %v1437, 2
    %v1439 = vadd.f32 %v1437, %v1438
    %v1440 = vrot.slane %v1439, 1
    %v1441 = vadd.f32 %v1439, %v1440
    %s1442 = vtos %v1441
    %s1443 = ssub.f32 0.0, %s1442
    %v1444 = vrcp.pop 12.0
    %s1445 = vtos %v1444
    %s1446 = smul.f32 %s1443, %s1445
    %v1447 = vmul.f32 %v740, 0.25
    %v1448 = vmul.f32 %v742, 0.25
    %v1449 = vmul.f32 %v744, 0.25
    %v1450 = vmul.f32 %v746, 0.25
    %v1451 = vmul.f32 %v748, 0.25
    %v1452 = vmul.f32 %v750, 0.25
    %v1453 = vmul.f32 %v752, 0.25
    %v1454 = vmul.f32 %v754, 0.25
    %v1463 = vlaneseq
    %v1464 = vshrl.u32 %v1463, 7
    %v1465 = vsub.s32 %v235, %v1464
    %v1466 = vrot.slane %v1447, %v1465
    %v1467 = vlaneseq
    %v1468 = vshrl.u32 %v1467, 7
    %v1469 = vsub.s32 %v235, %v1468
    %v1470 = vrot.slane %v1448, %v1469
    %v1471 = vlaneseq
    %v1472 = vshrl.u32 %v1471, 7
    %v1473 = vsub.s32 %v235, %v1472
    %v1474 = vrot.slane %v1449, %v1473
    %v1475 = vlaneseq
    %v1476 = vshrl.u32 %v1475, 7
    %v1477 = vsub.s32 %v235, %v1476
    %v1478 = vrot.slane %v1450, %v1477
    %v1479 = vlaneseq
    %v1480 = vshrl.u32 %v1479, 7
    %v1481 = vsub.s32 %v235, %v1480
    %v1482 = vrot.slane %v1451, %v1481
    %v1483 = vlaneseq
    %v1484 = vshrl.u32 %v1483, 7
    %v1485 = vsub.s32 %v235, %v1484
    %v1486 = vrot.slane %v1452, %v1485
    %v1487 = vlaneseq
    %v1488 = vshrl.u32 %v1487, 7
    %v1489 = vsub.s32 %v235, %v1488
    %v1490 = vrot.slane %v1453, %v1489
    %v1491 = vlaneseq
    %v1492 = vshrl.u32 %v1491, 7
    %v1493 = vsub.s32 %v235, %v1492
    %v1494 = vrot.slane %v1454, %v1493
    %v1495 = vsel %vm814, %v1470, %v1466
    %v1496 = vsel %vm816, %v1474, %v1495
    %v1497 = vsel %vm818, %v1478, %v1496
    %v1498 = vsel %vm820, %v1482, %v1497
    %v1499 = vsel %vm822, %v1486, %v1498
    %v1500 = vsel %vm824, %v1490, %v1499
    %v1501 = vsel %vm826, %v1494, %v1500
    %v1503 = vsel %vm829, %v1501, -inf
    %1504 = vmax.xlane.f32.xlu0 %v1503
    %v1505 = vpop.xlane.xlu0 %1504
    %v1507 = vlaneseq
    %v1508 = vshrl.u32 %v1507, 7
    %v1509 = vsub.s32 0, %v1508
    %v1510 = vrot.slane %v1505, %v1509
    %v1511 = vlaneseq
    %v1512 = vshrl.u32 %v1511, 7
    %v1513 = vsub.s32 1, %v1512
    %v1514 = vrot.slane %v1505, %v1513
    %v1515 = vlaneseq
    %v1516 = vshrl.u32 %v1515, 7
    %v1517 = vsub.s32 2, %v1516
    %v1518 = vrot.slane %v1505, %v1517
    %v1519 = vlaneseq
    %v1520 = vshrl.u32 %v1519, 7
    %v1521 = vsub.s32 3, %v1520
    %v1522 = vrot.slane %v1505, %v1521
    %v1523 = vlaneseq
    %v1524 = vshrl.u32 %v1523, 7
    %v1525 = vsub.s32 4, %v1524
    %v1526 = vrot.slane %v1505, %v1525
    %v1527 = vlaneseq
    %v1528 = vshrl.u32 %v1527, 7
    %v1529 = vsub.s32 5, %v1528
    %v1530 = vrot.slane %v1505, %v1529
    %v1531 = vlaneseq
    %v1532 = vshrl.u32 %v1531, 7
    %v1533 = vsub.s32 6, %v1532
    %v1534 = vrot.slane %v1505, %v1533
    %v1535 = vlaneseq
    %v1536 = vshrl.u32 %v1535, 7
    %v1537 = vsub.s32 7, %v1536
    %v1538 = vrot.slane %v1505, %v1537
    %v1547 = vsub.f32 %v1447, %v1510
    %v1548 = vsub.f32 %v1448, %v1514
    %v1549 = vsub.f32 %v1449, %v1518
    %v1550 = vsub.f32 %v1450, %v1522
    %v1551 = vsub.f32 %v1451, %v1526
    %v1552 = vsub.f32 %v1452, %v1530
    %v1553 = vsub.f32 %v1453, %v1534
    %v1554 = vsub.f32 %v1454, %v1538
    %v1555 = vmul.f32 %v1547, 1.442695
    %v1556 = vpow.pop %v1555
    %v1557 = vmul.f32 %v1548, 1.442695
    %v1558 = vpow.pop %v1557
    %v1559 = vmul.f32 %v1549, 1.442695
    %v1560 = vpow.pop %v1559
    %v1561 = vmul.f32 %v1550, 1.442695
    %v1562 = vpow.pop %v1561
    %v1563 = vmul.f32 %v1551, 1.442695
    %v1564 = vpow.pop %v1563
    %v1565 = vmul.f32 %v1552, 1.442695
    %v1566 = vpow.pop %v1565
    %v1567 = vmul.f32 %v1553, 1.442695
    %v1568 = vpow.pop %v1567
    %v1569 = vmul.f32 %v1554, 1.442695
    %v1570 = vpow.pop %v1569
    %1579 = vset.pattern.permute.xlu0 0
    %1580 = vperm.xlu0 %1579, %v1556
    %v1581 = vpop.permute.xlu0 %1580
    %1582 = vset.pattern.permute.xlu0 0
    %1583 = vperm.xlu0 %1582, %v1558
    %v1584 = vpop.permute.xlu0 %1583
    %1585 = vset.pattern.permute.xlu0 0
    %1586 = vperm.xlu0 %1585, %v1560
    %v1587 = vpop.permute.xlu0 %1586
    %1588 = vset.pattern.permute.xlu0 0
    %1589 = vperm.xlu0 %1588, %v1562
    %v1590 = vpop.permute.xlu0 %1589
    %1591 = vset.pattern.permute.xlu0 0
    %1592 = vperm.xlu0 %1591, %v1564
    %v1593 = vpop.permute.xlu0 %1592
    %1594 = vset.pattern.permute.xlu0 0
    %1595 = vperm.xlu0 %1594, %v1566
    %v1596 = vpop.permute.xlu0 %1595
    %1597 = vset.pattern.permute.xlu0 0
    %1598 = vperm.xlu0 %1597, %v1568
    %v1599 = vpop.permute.xlu0 %1598
    %1600 = vset.pattern.permute.xlu0 0
    %1601 = vperm.xlu0 %1600, %v1570
    %v1602 = vpop.permute.xlu0 %1601
    %v1603 = vlaneseq
    %v1604 = vshrl.u32 %v1603, 7
    %v1605 = vsub.s32 %v930, %v1604
    %v1606 = vrot.slane %v1581, %v1605
    %v1607 = vlaneseq
    %v1608 = vshrl.u32 %v1607, 7
    %v1609 = vsub.s32 %v930, %v1608
    %v1610 = vrot.slane %v1584, %v1609
    %v1611 = vlaneseq
    %v1612 = vshrl.u32 %v1611, 7
    %v1613 = vsub.s32 %v930, %v1612
    %v1614 = vrot.slane %v1587, %v1613
    %v1615 = vlaneseq
    %v1616 = vshrl.u32 %v1615, 7
    %v1617 = vsub.s32 %v930, %v1616
    %v1618 = vrot.slane %v1590, %v1617
    %v1619 = vlaneseq
    %v1620 = vshrl.u32 %v1619, 7
    %v1621 = vsub.s32 %v930, %v1620
    %v1622 = vrot.slane %v1593, %v1621
    %v1623 = vlaneseq
    %v1624 = vshrl.u32 %v1623, 7
    %v1625 = vsub.s32 %v930, %v1624
    %v1626 = vrot.slane %v1596, %v1625
    %v1627 = vlaneseq
    %v1628 = vshrl.u32 %v1627, 7
    %v1629 = vsub.s32 %v930, %v1628
    %v1630 = vrot.slane %v1599, %v1629
    %v1631 = vlaneseq
    %v1632 = vshrl.u32 %v1631, 7
    %v1633 = vsub.s32 %v930, %v1632
    %v1634 = vrot.slane %v1602, %v1633
    %v1635 = vsel %vm814, %v1610, %v1606
    %v1636 = vsel %vm816, %v1614, %v1635
    %v1637 = vsel %vm818, %v1618, %v1636
    %v1638 = vsel %vm820, %v1622, %v1637
    %v1639 = vsel %vm822, %v1626, %v1638
    %v1640 = vsel %vm824, %v1630, %v1639
    %v1641 = vsel %vm826, %v1634, %v1640
    %v1643 = vsel %vm971, %v1641, 0.0
    %1644 = vadd.xlane.f32.xlu0 %v1643
    %v1645 = vpop.xlane.xlu0 %1644
    %v1646 = vlog2.pop %v1645
    %v1647 = vmul.f32 %v1646, 0.6931472
    %v1649 = vlaneseq
    %v1650 = vshrl.u32 %v1649, 7
    %v1651 = vsub.s32 0, %v1650
    %v1652 = vrot.slane %v1647, %v1651
    %v1653 = vlaneseq
    %v1654 = vshrl.u32 %v1653, 7
    %v1655 = vsub.s32 1, %v1654
    %v1656 = vrot.slane %v1647, %v1655
    %v1657 = vlaneseq
    %v1658 = vshrl.u32 %v1657, 7
    %v1659 = vsub.s32 2, %v1658
    %v1660 = vrot.slane %v1647, %v1659
    %v1661 = vlaneseq
    %v1662 = vshrl.u32 %v1661, 7
    %v1663 = vsub.s32 3, %v1662
    %v1664 = vrot.slane %v1647, %v1663
    %v1665 = vlaneseq
    %v1666 = vshrl.u32 %v1665, 7
    %v1667 = vsub.s32 4, %v1666
    %v1668 = vrot.slane %v1647, %v1667
    %v1669 = vlaneseq
    %v1670 = vshrl.u32 %v1669, 7
    %v1671 = vsub.s32 5, %v1670
    %v1672 = vrot.slane %v1647, %v1671
    %v1673 = vlaneseq
    %v1674 = vshrl.u32 %v1673, 7
    %v1675 = vsub.s32 6, %v1674
    %v1676 = vrot.slane %v1647, %v1675
    %v1677 = vlaneseq
    %v1678 = vshrl.u32 %v1677, 7
    %v1679 = vsub.s32 7, %v1678
    %v1680 = vrot.slane %v1647, %v1679
    %v1689 = vsub.f32 %v1547, %v1652
    %v1690 = vsub.f32 %v1548, %v1656
    %v1691 = vsub.f32 %v1549, %v1660
    %v1692 = vsub.f32 %v1550, %v1664
    %v1693 = vsub.f32 %v1551, %v1668
    %v1694 = vsub.f32 %v1552, %v1672
    %v1695 = vsub.f32 %v1553, %v1676
    %v1696 = vsub.f32 %v1554, %v1680
    %v1697 = vmul.f32 %v1689, 1.442695
    %v1698 = vpow.pop %v1697
    %v1699 = vmul.f32 %v1690, 1.442695
    %v1700 = vpow.pop %v1699
    %v1701 = vmul.f32 %v1691, 1.442695
    %v1702 = vpow.pop %v1701
    %v1703 = vmul.f32 %v1692, 1.442695
    %v1704 = vpow.pop %v1703
    %v1705 = vmul.f32 %v1693, 1.442695
    %v1706 = vpow.pop %v1705
    %v1707 = vmul.f32 %v1694, 1.442695
    %v1708 = vpow.pop %v1707
    %v1709 = vmul.f32 %v1695, 1.442695
    %v1710 = vpow.pop %v1709
    %v1711 = vmul.f32 %v1696, 1.442695
    %v1712 = vpow.pop %v1711
    %v1713 = vsub.f32 %v1706, %v1698
    %v1714 = vsub.f32 %v1708, %v1700
    %v1715 = vsub.f32 %v1710, %v1702
    %v1716 = vsub.f32 %v1712, %v1704
    %v1717 = vsub.f32 %v1693, %v1689
    %v1718 = vsub.f32 %v1694, %v1690
    %v1719 = vsub.f32 %v1695, %v1691
    %v1720 = vsub.f32 %v1696, %v1692
    %v1721 = vmul.f32 %v1713, %v1717
    %v1722 = vmul.f32 %v1714, %v1718
    %v1723 = vmul.f32 %v1715, %v1719
    %v1724 = vmul.f32 %v1716, %v1720
    %1729 = vset.pattern.permute.xlu0 0
    %1730 = vperm.xlu0 %1729, %v1721
    %v1731 = vpop.permute.xlu0 %1730
    %1732 = vset.pattern.permute.xlu0 0
    %1733 = vperm.xlu0 %1732, %v1722
    %v1734 = vpop.permute.xlu0 %1733
    %1735 = vset.pattern.permute.xlu0 0
    %1736 = vperm.xlu0 %1735, %v1723
    %v1737 = vpop.permute.xlu0 %1736
    %1738 = vset.pattern.permute.xlu0 0
    %1739 = vperm.xlu0 %1738, %v1724
    %v1740 = vpop.permute.xlu0 %1739
    %v1741 = vlaneseq
    %v1742 = vshrl.u32 %v1741, 7
    %v1743 = vsub.s32 %v930, %v1742
    %v1744 = vrot.slane %v1731, %v1743
    %v1745 = vlaneseq
    %v1746 = vshrl.u32 %v1745, 7
    %v1747 = vsub.s32 %v930, %v1746
    %v1748 = vrot.slane %v1734, %v1747
    %v1749 = vlaneseq
    %v1750 = vshrl.u32 %v1749, 7
    %v1751 = vsub.s32 %v930, %v1750
    %v1752 = vrot.slane %v1737, %v1751
    %v1753 = vlaneseq
    %v1754 = vshrl.u32 %v1753, 7
    %v1755 = vsub.s32 %v930, %v1754
    %v1756 = vrot.slane %v1740, %v1755
    %v1757 = vsel %vm814, %v1748, %v1744
    %v1758 = vsel %vm816, %v1752, %v1757
    %v1759 = vsel %vm818, %v1756, %v1758
    %vm1761 = vcmask 52224
    %v1762 = vsel %vm1761, %v1759, 0.0
    %1763 = vadd.xlane.f32.xlu0 %v1762
    %v1764 = vpop.xlane.xlu0 %1763
    %v1765 = vrot.slane %v1764, 4
    %v1766 = vadd.f32 %v1764, %v1765
    %v1767 = vrot.slane %v1766, 2
    %v1768 = vadd.f32 %v1766, %v1767
    %v1769 = vrot.slane %v1768, 1
    %v1770 = vadd.f32 %v1768, %v1769
    %s1771 = vtos %v1770
    %s1772 = smul.f32 %s1771, 4.0
    %v1773 = vmul.f32 %v756, 0.25
    %v1774 = vmul.f32 %v758, 0.25
    %v1775 = vmul.f32 %v760, 0.25
    %v1776 = vmul.f32 %v762, 0.25
    %v1777 = vmul.f32 %v764, 0.25
    %v1778 = vmul.f32 %v766, 0.25
    %v1779 = vmul.f32 %v768, 0.25
    %v1780 = vmul.f32 %v770, 0.25
    %v1789 = vlaneseq
    %v1790 = vshrl.u32 %v1789, 7
    %v1791 = vsub.s32 %v235, %v1790
    %v1792 = vrot.slane %v1773, %v1791
    %v1793 = vlaneseq
    %v1794 = vshrl.u32 %v1793, 7
    %v1795 = vsub.s32 %v235, %v1794
    %v1796 = vrot.slane %v1774, %v1795
    %v1797 = vlaneseq
    %v1798 = vshrl.u32 %v1797, 7
    %v1799 = vsub.s32 %v235, %v1798
    %v1800 = vrot.slane %v1775, %v1799
    %v1801 = vlaneseq
    %v1802 = vshrl.u32 %v1801, 7
    %v1803 = vsub.s32 %v235, %v1802
    %v1804 = vrot.slane %v1776, %v1803
    %v1805 = vlaneseq
    %v1806 = vshrl.u32 %v1805, 7
    %v1807 = vsub.s32 %v235, %v1806
    %v1808 = vrot.slane %v1777, %v1807
    %v1809 = vlaneseq
    %v1810 = vshrl.u32 %v1809, 7
    %v1811 = vsub.s32 %v235, %v1810
    %v1812 = vrot.slane %v1778, %v1811
    %v1813 = vlaneseq
    %v1814 = vshrl.u32 %v1813, 7
    %v1815 = vsub.s32 %v235, %v1814
    %v1816 = vrot.slane %v1779, %v1815
    %v1817 = vlaneseq
    %v1818 = vshrl.u32 %v1817, 7
    %v1819 = vsub.s32 %v235, %v1818
    %v1820 = vrot.slane %v1780, %v1819
    %v1821 = vsel %vm814, %v1796, %v1792
    %v1822 = vsel %vm816, %v1800, %v1821
    %v1823 = vsel %vm818, %v1804, %v1822
    %v1824 = vsel %vm820, %v1808, %v1823
    %v1825 = vsel %vm822, %v1812, %v1824
    %v1826 = vsel %vm824, %v1816, %v1825
    %v1827 = vsel %vm826, %v1820, %v1826
    %v1829 = vsel %vm1165, %v1827, -inf
    %1830 = vmax.xlane.f32.xlu0 %v1829
    %v1831 = vpop.xlane.xlu0 %1830
    %v1833 = vlaneseq
    %v1834 = vshrl.u32 %v1833, 7
    %v1835 = vsub.s32 0, %v1834
    %v1836 = vrot.slane %v1831, %v1835
    %v1837 = vlaneseq
    %v1838 = vshrl.u32 %v1837, 7
    %v1839 = vsub.s32 1, %v1838
    %v1840 = vrot.slane %v1831, %v1839
    %v1841 = vlaneseq
    %v1842 = vshrl.u32 %v1841, 7
    %v1843 = vsub.s32 2, %v1842
    %v1844 = vrot.slane %v1831, %v1843
    %v1845 = vlaneseq
    %v1846 = vshrl.u32 %v1845, 7
    %v1847 = vsub.s32 3, %v1846
    %v1848 = vrot.slane %v1831, %v1847
    %v1849 = vlaneseq
    %v1850 = vshrl.u32 %v1849, 7
    %v1851 = vsub.s32 4, %v1850
    %v1852 = vrot.slane %v1831, %v1851
    %v1853 = vlaneseq
    %v1854 = vshrl.u32 %v1853, 7
    %v1855 = vsub.s32 5, %v1854
    %v1856 = vrot.slane %v1831, %v1855
    %v1857 = vlaneseq
    %v1858 = vshrl.u32 %v1857, 7
    %v1859 = vsub.s32 6, %v1858
    %v1860 = vrot.slane %v1831, %v1859
    %v1861 = vlaneseq
    %v1862 = vshrl.u32 %v1861, 7
    %v1863 = vsub.s32 7, %v1862
    %v1864 = vrot.slane %v1831, %v1863
    %v1873 = vsub.f32 %v1773, %v1836
    %v1874 = vsub.f32 %v1774, %v1840
    %v1875 = vsub.f32 %v1775, %v1844
    %v1876 = vsub.f32 %v1776, %v1848
    %v1877 = vsub.f32 %v1777, %v1852
    %v1878 = vsub.f32 %v1778, %v1856
    %v1879 = vsub.f32 %v1779, %v1860
    %v1880 = vsub.f32 %v1780, %v1864
    %v1881 = vmul.f32 %v1873, 1.442695
    %v1882 = vpow.pop %v1881
    %v1883 = vmul.f32 %v1874, 1.442695
    %v1884 = vpow.pop %v1883
    %v1885 = vmul.f32 %v1875, 1.442695
    %v1886 = vpow.pop %v1885
    %v1887 = vmul.f32 %v1876, 1.442695
    %v1888 = vpow.pop %v1887
    %v1889 = vmul.f32 %v1877, 1.442695
    %v1890 = vpow.pop %v1889
    %v1891 = vmul.f32 %v1878, 1.442695
    %v1892 = vpow.pop %v1891
    %v1893 = vmul.f32 %v1879, 1.442695
    %v1894 = vpow.pop %v1893
    %v1895 = vmul.f32 %v1880, 1.442695
    %v1896 = vpow.pop %v1895
    %1905 = vset.pattern.permute.xlu0 0
    %1906 = vperm.xlu0 %1905, %v1882
    %v1907 = vpop.permute.xlu0 %1906
    %1908 = vset.pattern.permute.xlu0 0
    %1909 = vperm.xlu0 %1908, %v1884
    %v1910 = vpop.permute.xlu0 %1909
    %1911 = vset.pattern.permute.xlu0 0
    %1912 = vperm.xlu0 %1911, %v1886
    %v1913 = vpop.permute.xlu0 %1912
    %1914 = vset.pattern.permute.xlu0 0
    %1915 = vperm.xlu0 %1914, %v1888
    %v1916 = vpop.permute.xlu0 %1915
    %1917 = vset.pattern.permute.xlu0 0
    %1918 = vperm.xlu0 %1917, %v1890
    %v1919 = vpop.permute.xlu0 %1918
    %1920 = vset.pattern.permute.xlu0 0
    %1921 = vperm.xlu0 %1920, %v1892
    %v1922 = vpop.permute.xlu0 %1921
    %1923 = vset.pattern.permute.xlu0 0
    %1924 = vperm.xlu0 %1923, %v1894
    %v1925 = vpop.permute.xlu0 %1924
    %1926 = vset.pattern.permute.xlu0 0
    %1927 = vperm.xlu0 %1926, %v1896
    %v1928 = vpop.permute.xlu0 %1927
    %v1929 = vlaneseq
    %v1930 = vshrl.u32 %v1929, 7
    %v1931 = vsub.s32 %v235, %v1930
    %v1932 = vrot.slane %v1907, %v1931
    %v1933 = vlaneseq
    %v1934 = vshrl.u32 %v1933, 7
    %v1935 = vsub.s32 %v235, %v1934
    %v1936 = vrot.slane %v1910, %v1935
    %v1937 = vlaneseq
    %v1938 = vshrl.u32 %v1937, 7
    %v1939 = vsub.s32 %v235, %v1938
    %v1940 = vrot.slane %v1913, %v1939
    %v1941 = vlaneseq
    %v1942 = vshrl.u32 %v1941, 7
    %v1943 = vsub.s32 %v235, %v1942
    %v1944 = vrot.slane %v1916, %v1943
    %v1945 = vlaneseq
    %v1946 = vshrl.u32 %v1945, 7
    %v1947 = vsub.s32 %v235, %v1946
    %v1948 = vrot.slane %v1919, %v1947
    %v1949 = vlaneseq
    %v1950 = vshrl.u32 %v1949, 7
    %v1951 = vsub.s32 %v235, %v1950
    %v1952 = vrot.slane %v1922, %v1951
    %v1953 = vlaneseq
    %v1954 = vshrl.u32 %v1953, 7
    %v1955 = vsub.s32 %v235, %v1954
    %v1956 = vrot.slane %v1925, %v1955
    %v1957 = vlaneseq
    %v1958 = vshrl.u32 %v1957, 7
    %v1959 = vsub.s32 %v235, %v1958
    %v1960 = vrot.slane %v1928, %v1959
    %v1961 = vsel %vm814, %v1936, %v1932
    %v1962 = vsel %vm816, %v1940, %v1961
    %v1963 = vsel %vm818, %v1944, %v1962
    %v1964 = vsel %vm820, %v1948, %v1963
    %v1965 = vsel %vm822, %v1952, %v1964
    %v1966 = vsel %vm824, %v1956, %v1965
    %v1967 = vsel %vm826, %v1960, %v1966
    %v1969 = vsel %vm1165, %v1967, 0.0
    %1970 = vadd.xlane.f32.xlu0 %v1969
    %v1971 = vpop.xlane.xlu0 %1970
    %v1972 = vlog2.pop %v1971
    %v1973 = vmul.f32 %v1972, 0.6931472
    %v1975 = vlaneseq
    %v1976 = vshrl.u32 %v1975, 7
    %v1977 = vsub.s32 0, %v1976
    %v1978 = vrot.slane %v1973, %v1977
    %v1979 = vlaneseq
    %v1980 = vshrl.u32 %v1979, 7
    %v1981 = vsub.s32 1, %v1980
    %v1982 = vrot.slane %v1973, %v1981
    %v1983 = vlaneseq
    %v1984 = vshrl.u32 %v1983, 7
    %v1985 = vsub.s32 2, %v1984
    %v1986 = vrot.slane %v1973, %v1985
    %v1987 = vlaneseq
    %v1988 = vshrl.u32 %v1987, 7
    %v1989 = vsub.s32 3, %v1988
    %v1990 = vrot.slane %v1973, %v1989
    %v1991 = vlaneseq
    %v1992 = vshrl.u32 %v1991, 7
    %v1993 = vsub.s32 4, %v1992
    %v1994 = vrot.slane %v1973, %v1993
    %v1995 = vlaneseq
    %v1996 = vshrl.u32 %v1995, 7
    %v1997 = vsub.s32 5, %v1996
    %v1998 = vrot.slane %v1973, %v1997
    %v1999 = vlaneseq
    %v2000 = vshrl.u32 %v1999, 7
    %v2001 = vsub.s32 6, %v2000
    %v2002 = vrot.slane %v1973, %v2001
    %v2003 = vlaneseq
    %v2004 = vshrl.u32 %v2003, 7
    %v2005 = vsub.s32 7, %v2004
    %v2006 = vrot.slane %v1973, %v2005
    %v2015 = vsub.f32 %v1873, %v1978
    %v2016 = vsub.f32 %v1874, %v1982
    %v2017 = vsub.f32 %v1875, %v1986
    %v2018 = vsub.f32 %v1876, %v1990
    %v2019 = vsub.f32 %v1877, %v1994
    %v2020 = vsub.f32 %v1878, %v1998
    %v2021 = vsub.f32 %v1879, %v2002
    %v2022 = vsub.f32 %v1880, %v2006
    %v2023 = vmul.f32 %v2015, 1.442695
    %v2024 = vpow.pop %v2023
    %v2025 = vmul.f32 %v2016, 1.442695
    %v2026 = vpow.pop %v2025
    %v2027 = vmul.f32 %v2017, 1.442695
    %v2028 = vpow.pop %v2027
    %v2029 = vmul.f32 %v2018, 1.442695
    %v2030 = vpow.pop %v2029
    %v2031 = vmul.f32 %v2019, 1.442695
    %v2032 = vpow.pop %v2031
    %v2033 = vmul.f32 %v2020, 1.442695
    %v2034 = vpow.pop %v2033
    %v2035 = vmul.f32 %v2021, 1.442695
    %v2036 = vpow.pop %v2035
    %v2037 = vmul.f32 %v2022, 1.442695
    %v2038 = vpow.pop %v2037
    %v2039 = vsub.f32 %v2032, %v2024
    %v2040 = vsub.f32 %v2034, %v2026
    %v2041 = vsub.f32 %v2036, %v2028
    %v2042 = vsub.f32 %v2038, %v2030
    %v2043 = vsub.f32 %v2019, %v2015
    %v2044 = vsub.f32 %v2020, %v2016
    %v2045 = vsub.f32 %v2021, %v2017
    %v2046 = vsub.f32 %v2022, %v2018
    %v2047 = vmul.f32 %v2039, %v2043
    %v2048 = vmul.f32 %v2040, %v2044
    %v2049 = vmul.f32 %v2041, %v2045
    %v2050 = vmul.f32 %v2042, %v2046
    %2055 = vset.pattern.permute.xlu0 0
    %2056 = vperm.xlu0 %2055, %v2047
    %v2057 = vpop.permute.xlu0 %2056
    %2058 = vset.pattern.permute.xlu0 0
    %2059 = vperm.xlu0 %2058, %v2048
    %v2060 = vpop.permute.xlu0 %2059
    %2061 = vset.pattern.permute.xlu0 0
    %2062 = vperm.xlu0 %2061, %v2049
    %v2063 = vpop.permute.xlu0 %2062
    %2064 = vset.pattern.permute.xlu0 0
    %2065 = vperm.xlu0 %2064, %v2050
    %v2066 = vpop.permute.xlu0 %2065
    %v2067 = vlaneseq
    %v2068 = vshrl.u32 %v2067, 7
    %v2069 = vsub.s32 %v235, %v2068
    %v2070 = vrot.slane %v2057, %v2069
    %v2071 = vlaneseq
    %v2072 = vshrl.u32 %v2071, 7
    %v2073 = vsub.s32 %v235, %v2072
    %v2074 = vrot.slane %v2060, %v2073
    %v2075 = vlaneseq
    %v2076 = vshrl.u32 %v2075, 7
    %v2077 = vsub.s32 %v235, %v2076
    %v2078 = vrot.slane %v2063, %v2077
    %v2079 = vlaneseq
    %v2080 = vshrl.u32 %v2079, 7
    %v2081 = vsub.s32 %v235, %v2080
    %v2082 = vrot.slane %v2066, %v2081
    %v2083 = vsel %vm814, %v2074, %v2070
    %v2084 = vsel %vm816, %v2078, %v2083
    %v2085 = vsel %vm818, %v2082, %v2084
    %vm2087 = vcmask 60416
    %v2088 = vsel %vm2087, %v2085, 0.0
    %2089 = vadd.xlane.f32.xlu0 %v2088
    %v2090 = vpop.xlane.xlu0 %2089
    %v2091 = vrot.slane %v2090, 4
    %v2092 = vadd.f32 %v2090, %v2091
    %v2093 = vrot.slane %v2092, 2
    %v2094 = vadd.f32 %v2092, %v2093
    %v2095 = vrot.slane %v2094, 1
    %v2096 = vadd.f32 %v2094, %v2095
    %s2097 = vtos %v2096
    %s2098 = smul.f32 %s2097, 4.0
    %vm2099 = vcmp.eq.s32.totalorder %v235, 0
    %v2100 = vstv %s1116
    %v2101 = vsel %vm2099, %v2100, 0.0
    %vm2102 = vcmp.eq.s32.totalorder %v235, 1
    %v2103 = vstv %s1772
    %v2104 = vsel %vm2102, %v2103, 0.0
    %v2105 = vadd.f32 %v2101, %v2104
    %vm2106 = vcmp.eq.s32.totalorder %v235, 2
    %v2107 = vstv %s1446
    %v2108 = vsel %vm2106, %v2107, 0.0
    %v2109 = vadd.f32 %v2105, %v2108
    %vm2110 = vcmp.eq.s32.totalorder %v235, 3
    %v2111 = vstv %s2098
    %v2112 = vsel %vm2110, %v2111, 0.0
    %v2113 = vadd.f32 %v2109, %v2112
    %vm2114 = vcmask 24576
    %2115 = vst.msk [vmem:[#allocation2] sm:$0x1] %vm2114, %v2113
    %v2116 = vld [vmem:[%s1] sm:$0x1]
    %v2117 = vadd.s32 %v2116, 128
    %v2118 = vlaneseq
    %v2119 = vshrl.u32 %v2118, 7
    %v2120 = vsub.s32 0, %v2119
    %v2121 = vrot.slane %v2117, %v2120
    %2122 = vrot.lane.b32.xlu0 %v2121, 4
    %v2123 = vpop.permute.xlu0 %2122
    %vm2124 = vcmask 31744
    %v2125 = vsel %vm2124, %v2116, %v2123
    %v2126 = vadd.s32 %v460, 128
    %v2127 = vrot.slane %v2126, 4
    %v2128 = vsel %vm246, %v460, %v2127
    %v2129 = vadd.s32 %v235, 128
    %2130 = vset.pattern.permute.xlu0 0
    %2131 = vperm.xlu0 %2130, %v2128
    %v2132 = vpop.permute.xlu0 %2131
    %vm2133 = vcmp.eq.s32.totalorder %v235, %v2132
    %vm2134 = vcmp.eq.s32.totalorder %v2129, %v2132
    %v2135 = vsel %vm2133, 1, 0
    %v2136 = vsel %vm2134, 1, 0
    %v2137 = vcvt.s32.f32 %v2135
    %v2138 = vcvt.s32.f32 %v2136
    %v2139 = vlaneseq
    %v2140 = vshrl.u32 %v2139, 7
    %v2141 = vadd.s32 %v2140, 8
    %v2142 = vadd.s32 %v2140, 16
    %v2143 = vadd.s32 %v2140, 24
    %v2144 = vadd.s32 %v2140, 32
    %v2145 = vadd.s32 %v2140, 40
    %v2146 = vadd.s32 %v2140, 48
    %v2147 = vadd.s32 %v2140, 56
    %v2148 = vadd.s32 %v2140, 64
    %v2149 = vadd.s32 %v2140, 72
    %v2150 = vadd.s32 %v2140, 80
    %v2151 = vadd.s32 %v2140, 88
    %v2152 = vadd.s32 %v2140, 96
    %v2153 = vadd.s32 %v2140, 104
    %v2154 = vadd.s32 %v2140, 112
    %v2155 = vadd.s32 %v2140, 120
    %v2156 = vadd.s32 %v2140, 128
    %v2157 = vadd.s32 %v2140, 136
    %v2158 = vadd.s32 %v2140, 144
    %v2159 = vadd.s32 %v2140, 152
    %v2160 = vadd.s32 %v2140, 160
    %v2161 = vadd.s32 %v2140, 168
    %v2162 = vadd.s32 %v2140, 176
    %v2163 = vadd.s32 %v2140, 184
    %v2164 = vadd.s32 %v2140, 192
    %v2165 = vadd.s32 %v2140, 200
    %v2166 = vadd.s32 %v2140, 208
    %v2167 = vadd.s32 %v2140, 216
    %v2168 = vadd.s32 %v2140, 224
    %v2169 = vadd.s32 %v2140, 232
    %v2170 = vadd.s32 %v2140, 240
    %v2171 = vadd.s32 %v2140, 248
    %v2172 = vlaneseq
    %v2173 = vshrl.u32 %v2172, 7
    %v2174 = vsub.s32 0, %v2173
    %v2175 = vrot.slane %v2125, %v2174
    %vm2176 = vcmp.eq.s32.totalorder %v2140, %v2175
    %vm2177 = vcmp.eq.s32.totalorder %v2141, %v2175
    %vm2178 = vcmp.eq.s32.totalorder %v2142, %v2175
    %vm2179 = vcmp.eq.s32.totalorder %v2143, %v2175
    %vm2180 = vcmp.eq.s32.totalorder %v2144, %v2175
    %vm2181 = vcmp.eq.s32.totalorder %v2145, %v2175
    %vm2182 = vcmp.eq.s32.totalorder %v2146, %v2175
    %vm2183 = vcmp.eq.s32.totalorder %v2147, %v2175
    %vm2184 = vcmp.eq.s32.totalorder %v2148, %v2175
    %vm2185 = vcmp.eq.s32.totalorder %v2149, %v2175
    %vm2186 = vcmp.eq.s32.totalorder %v2150, %v2175
    %vm2187 = vcmp.eq.s32.totalorder %v2151, %v2175
    %vm2188 = vcmp.eq.s32.totalorder %v2152, %v2175
    %vm2189 = vcmp.eq.s32.totalorder %v2153, %v2175
    %vm2190 = vcmp.eq.s32.totalorder %v2154, %v2175
    %vm2191 = vcmp.eq.s32.totalorder %v2155, %v2175
    %vm2192 = vcmp.eq.s32.totalorder %v2156, %v2175
    %vm2193 = vcmp.eq.s32.totalorder %v2157, %v2175
    %vm2194 = vcmp.eq.s32.totalorder %v2158, %v2175
    %vm2195 = vcmp.eq.s32.totalorder %v2159, %v2175
    %vm2196 = vcmp.eq.s32.totalorder %v2160, %v2175
    %vm2197 = vcmp.eq.s32.totalorder %v2161, %v2175
    %vm2198 = vcmp.eq.s32.totalorder %v2162, %v2175
    %vm2199 = vcmp.eq.s32.totalorder %v2163, %v2175
    %vm2200 = vcmp.eq.s32.totalorder %v2164, %v2175
    %vm2201 = vcmp.eq.s32.totalorder %v2165, %v2175
    %vm2202 = vcmp.eq.s32.totalorder %v2166, %v2175
    %vm2203 = vcmp.eq.s32.totalorder %v2167, %v2175
    %vm2204 = vcmp.eq.s32.totalorder %v2168, %v2175
    %vm2205 = vcmp.eq.s32.totalorder %v2169, %v2175
    %vm2206 = vcmp.eq.s32.totalorder %v2170, %v2175
    %vm2207 = vcmp.eq.s32.totalorder %v2171, %v2175
    %v2208 = vsel %vm2176, 1, 0
    %v2209 = vsel %vm2177, 1, 0
    %v2210 = vsel %vm2178, 1, 0
    %v2211 = vsel %vm2179, 1, 0
    %v2212 = vsel %vm2180, 1, 0
    %v2213 = vsel %vm2181, 1, 0
    %v2214 = vsel %vm2182, 1, 0
    %v2215 = vsel %vm2183, 1, 0
    %v2216 = vsel %vm2184, 1, 0
    %v2217 = vsel %vm2185, 1, 0
    %v2218 = vsel %vm2186, 1, 0
    %v2219 = vsel %vm2187, 1, 0
    %v2220 = vsel %vm2188, 1, 0
    %v2221 = vsel %vm2189, 1, 0
    %v2222 = vsel %vm2190, 1, 0
    %v2223 = vsel %vm2191, 1, 0
    %v2224 = vsel %vm2192, 1, 0
    %v2225 = vsel %vm2193, 1, 0
    %v2226 = vsel %vm2194, 1, 0
    %v2227 = vsel %vm2195, 1, 0
    %v2228 = vsel %vm2196, 1, 0
    %v2229 = vsel %vm2197, 1, 0
    %v2230 = vsel %vm2198, 1, 0
    %v2231 = vsel %vm2199, 1, 0
    %v2232 = vsel %vm2200, 1, 0
    %v2233 = vsel %vm2201, 1, 0
    %v2234 = vsel %vm2202, 1, 0
    %v2235 = vsel %vm2203, 1, 0
    %v2236 = vsel %vm2204, 1, 0
    %v2237 = vsel %vm2205, 1, 0
    %v2238 = vsel %vm2206, 1, 0
    %v2239 = vsel %vm2207, 1, 0
    %v2240 = vcvt.s32.f32 %v2208
    %v2241 = vcvt.s32.f32 %v2209
    %v2242 = vcvt.s32.f32 %v2210
    %v2243 = vcvt.s32.f32 %v2211
    %v2244 = vcvt.s32.f32 %v2212
    %v2245 = vcvt.s32.f32 %v2213
    %v2246 = vcvt.s32.f32 %v2214
    %v2247 = vcvt.s32.f32 %v2215
    %v2248 = vcvt.s32.f32 %v2216
    %v2249 = vcvt.s32.f32 %v2217
    %v2250 = vcvt.s32.f32 %v2218
    %v2251 = vcvt.s32.f32 %v2219
    %v2252 = vcvt.s32.f32 %v2220
    %v2253 = vcvt.s32.f32 %v2221
    %v2254 = vcvt.s32.f32 %v2222
    %v2255 = vcvt.s32.f32 %v2223
    %v2256 = vcvt.s32.f32 %v2224
    %v2257 = vcvt.s32.f32 %v2225
    %v2258 = vcvt.s32.f32 %v2226
    %v2259 = vcvt.s32.f32 %v2227
    %v2260 = vcvt.s32.f32 %v2228
    %v2261 = vcvt.s32.f32 %v2229
    %v2262 = vcvt.s32.f32 %v2230
    %v2263 = vcvt.s32.f32 %v2231
    %v2264 = vcvt.s32.f32 %v2232
    %v2265 = vcvt.s32.f32 %v2233
    %v2266 = vcvt.s32.f32 %v2234
    %v2267 = vcvt.s32.f32 %v2235
    %v2268 = vcvt.s32.f32 %v2236
    %v2269 = vcvt.s32.f32 %v2237
    %v2270 = vcvt.s32.f32 %v2238
    %v2271 = vcvt.s32.f32 %v2239
    %2272 = vmatprep.subr.mxu0 0.0
    %2273 = vmatpush1.msra.mxu0 %v248
    %2274 = vmatprep.subr.mxu0 0.0
    %2275 = vmatpush1.msra.mxu0 %v249
    %2276 = vmatprep.subr.mxu0 0.0
    %2277 = vmatpush1.msra.mxu0 %v250
    %2278 = vmatprep.subr.mxu0 0.0
    %2279 = vmatpush1.msra.mxu0 %v251
    %2280 = vmatprep.subr.mxu0 0.0
    %2281 = vmatpush1.msra.mxu0 %v252
    %2282 = vmatprep.subr.mxu0 0.0
    %2283 = vmatpush1.msra.mxu0 %v253
    %2284 = vmatprep.subr.mxu0 0.0
    %2285 = vmatpush1.msra.mxu0 %v254
    %2286 = vmatprep.subr.mxu0 0.0
    %2287 = vmatpush1.msra.mxu0 %v255
    %2288 = vmatprep.subr.mxu0 0.0
    %2289 = vmatpush1.msra.mxu0 %v256
    %2290 = vmatprep.subr.mxu0 0.0
    %2291 = vmatpush1.msra.mxu0 %v257
    %2292 = vmatprep.subr.mxu0 0.0
    %2293 = vmatpush1.msra.mxu0 %v258
    %2294 = vmatprep.subr.mxu0 0.0
    %2295 = vmatpush1.msra.mxu0 %v259
    %2296 = vmatprep.subr.mxu0 0.0
    %2297 = vmatpush1.msra.mxu0 %v260
    %2298 = vmatprep.subr.mxu0 0.0
    %2299 = vmatpush1.msra.mxu0 %v261
    %2300 = vmatprep.subr.mxu0 0.0
    %2301 = vmatpush1.msra.mxu0 %v262
    %2302 = vmatprep.subr.mxu0 0.0
    %2303 = vmatpush1.msra.mxu0 %v263
    %2304 = vmatprep.subr.mxu0 0.0
    %2305 = vmatpush1.msra.mxu0 %v264
    %2306 = vmatprep.subr.mxu0 0.0
    %2307 = vmatpush1.msra.mxu0 %v265
    %2308 = vmatprep.subr.mxu0 0.0
    %2309 = vmatpush1.msra.mxu0 %v266
    %2310 = vmatprep.subr.mxu0 0.0
    %2311 = vmatpush1.msra.mxu0 %v267
    %2312 = vmatprep.subr.mxu0 0.0
    %2313 = vmatpush1.msra.mxu0 %v268
    %2314 = vmatprep.subr.mxu0 0.0
    %2315 = vmatpush1.msra.mxu0 %v269
    %2316 = vmatprep.subr.mxu0 0.0
    %2317 = vmatpush1.msra.mxu0 %v270
    %2318 = vmatprep.subr.mxu0 0.0
    %2319 = vmatpush1.msra.mxu0 %v271
    %2320 = vmatprep.subr.mxu0 0.0
    %2321 = vmatpush1.msra.mxu0 %v272
    %2322 = vmatprep.subr.mxu0 0.0
    %2323 = vmatpush1.msra.mxu0 %v273
    %2324 = vmatprep.subr.mxu0 0.0
    %2325 = vmatpush1.msra.mxu0 %v274
    %2326 = vmatprep.subr.mxu0 0.0
    %2327 = vmatpush1.msra.mxu0 %v275
    %2328 = vmatprep.subr.mxu0 0.0
    %2329 = vmatpush1.msra.mxu0 %v276
    %2330 = vmatprep.subr.mxu0 0.0
    %2331 = vmatpush1.msra.mxu0 %v277
    %2332 = vmatprep.subr.mxu0 0.0
    %2333 = vmatpush1.msra.mxu0 %v278
    %2334 = vmatprep.subr.mxu0 0.0
    %2335 = vmatpush1.msra.mxu0 %v279
    %2336 = vmatprep.mubr.f32.mxu0 %v2138
    %2337 = vmatmul.mubr.f32.gmra.mrb[0].mxu0 %v2137
    %v2338 = vpop.f32.mrb[0].mxu0
    %v2339 = vadd.f32 0.0, %v2338
    %v2340 = vpop.f32.mrb[0].mxu0
    %2341 = vdwg.mxu0
    %v2342 = vmul.f32 %v2339, 0.5
    %v2343 = vmul.f32 %v247, 0.5
    %v2344 = vadd.f32 %v2342, %v2343
    %v2345 = vmul.f32 %v2344, %v2344
    %v2346 = vsel %vm281, %v2345, 0.0
    %2347 = vadd.xlane.f32.xlu0 %v2346
    %v2348 = vpop.xlane.xlu0 %2347
    %v2349 = vadd.f32 %v2348, 1e-12
    %v2350 = vrsqrt.pop %v2349
    %v2351 = vmul.f32 %v2344, %v2350
    %v2353 = vsel %vm1165, %v2240, 0
    %v2356 = vsel %vm1165, %v2241, 0
    %v2359 = vsel %vm1165, %v2242, 0
    %v2362 = vsel %vm1165, %v2243, 0
    %v2365 = vsel %vm1165, %v2244, 0
    %v2368 = vsel %vm1165, %v2245, 0
    %v2371 = vsel %vm1165, %v2246, 0
    %v2374 = vsel %vm1165, %v2247, 0
    %v2377 = vsel %vm1165, %v2248, 0
    %v2380 = vsel %vm1165, %v2249, 0
    %v2383 = vsel %vm1165, %v2250, 0
    %v2386 = vsel %vm1165, %v2251, 0
    %v2389 = vsel %vm1165, %v2252, 0
    %v2392 = vsel %vm1165, %v2253, 0
    %v2395 = vsel %vm1165, %v2254, 0
    %v2398 = vsel %vm1165, %v2255, 0
    %v2401 = vsel %vm1165, %v2256, 0
    %v2404 = vsel %vm1165, %v2257, 0
    %v2407 = vsel %vm1165, %v2258, 0
    %v2410 = vsel %vm1165, %v2259, 0
    %v2413 = vsel %vm1165, %v2260, 0
    %v2416 = vsel %vm1165, %v2261, 0
    %v2419 = vsel %vm1165, %v2262, 0
    %v2422 = vsel %vm1165, %v2263, 0
    %v2425 = vsel %vm1165, %v2264, 0
    %v2428 = vsel %vm1165, %v2265, 0
    %v2431 = vsel %vm1165, %v2266, 0
    %v2434 = vsel %vm1165, %v2267, 0
    %v2437 = vsel %vm1165, %v2268, 0
    %v2440 = vsel %vm1165, %v2269, 0
    %v2443 = vsel %vm1165, %v2270, 0
    %v2446 = vsel %vm1165, %v2271, 0
    %2448 = vmatprep.subr.mxu0 0.0
    %2449 = vmatpush1.msra.mxu0 %v2351
    %2450 = vmatprep.subr.mxu0 0.0
    %2451 = vmatpush1.msra.mxu0 0.0
    %2452 = vmatprep.subr.mxu0 0.0
    %2453 = vmatpush1.msra.mxu0 0.0
    %2454 = vmatprep.subr.mxu0 0.0
    %2455 = vmatpush1.msra.mxu0 0.0
    %2456 = vmatprep.subr.mxu0 0.0
    %2457 = vmatpush1.msra.mxu0 0.0
    %2458 = vmatprep.subr.mxu0 0.0
    %2459 = vmatpush1.msra.mxu0 0.0
    %2460 = vmatprep.subr.mxu0 0.0
    %2461 = vmatpush1.msra.mxu0 0.0
    %2462 = vmatprep.subr.mxu0 0.0
    %2463 = vmatpush1.msra.mxu0 0.0
    %2464 = vmatprep.subr.mxu0 0.0
    %2465 = vmatpush1.msra.mxu0 0.0
    %2466 = vmatprep.subr.mxu0 0.0
    %2467 = vmatpush1.msra.mxu0 0.0
    %2468 = vmatprep.subr.mxu0 0.0
    %2469 = vmatpush1.msra.mxu0 0.0
    %2470 = vmatprep.subr.mxu0 0.0
    %2471 = vmatpush1.msra.mxu0 0.0
    %2472 = vmatprep.subr.mxu0 0.0
    %2473 = vmatpush1.msra.mxu0 0.0
    %2474 = vmatprep.subr.mxu0 0.0
    %2475 = vmatpush1.msra.mxu0 0.0
    %2476 = vmatprep.subr.mxu0 0.0
    %2477 = vmatpush1.msra.mxu0 0.0
    %2478 = vmatprep.subr.mxu0 0.0
    %2479 = vmatpush1.msra.mxu0 0.0
    %2480 = vmatprep.subr.mxu0 0.0
    %2481 = vmatpush1.msra.mxu0 0.0
    %2482 = vmatprep.subr.mxu0 0.0
    %2483 = vmatpush1.msra.mxu0 0.0
    %2484 = vmatprep.subr.mxu0 0.0
    %2485 = vmatpush1.msra.mxu0 0.0
    %2486 = vmatprep.subr.mxu0 0.0
    %2487 = vmatpush1.msra.mxu0 0.0
    %2488 = vmatprep.subr.mxu0 0.0
    %2489 = vmatpush1.msra.mxu0 0.0
    %2490 = vmatprep.subr.mxu0 0.0
    %2491 = vmatpush1.msra.mxu0 0.0
    %2492 = vmatprep.subr.mxu0 0.0
    %2493 = vmatpush1.msra.mxu0 0.0
    %2494 = vmatprep.subr.mxu0 0.0
    %2495 = vmatpush1.msra.mxu0 0.0
    %2496 = vmatprep.subr.mxu0 0.0
    %2497 = vmatpush1.msra.mxu0 0.0
    %2498 = vmatprep.subr.mxu0 0.0
    %2499 = vmatpush1.msra.mxu0 0.0
    %2500 = vmatprep.subr.mxu0 0.0
    %2501 = vmatpush1.msra.mxu0 0.0
    %2502 = vmatprep.subr.mxu0 0.0
    %2503 = vmatpush1.msra.mxu0 0.0
    %2504 = vmatprep.subr.mxu0 0.0
    %2505 = vmatpush1.msra.mxu0 0.0
    %2506 = vmatprep.subr.mxu0 0.0
    %2507 = vmatpush1.msra.mxu0 0.0
    %2508 = vmatprep.subr.mxu0 0.0
    %2509 = vmatpush1.msra.mxu0 0.0
    %2510 = vmatprep.subr.mxu0 0.0
    %2511 = vmatpush1.msra.mxu0 0.0
    %2512 = vmatprep.mubr.f32.mxu0 0.0
    %2513 = vmatmul.mubr.f32.gmra.mrb[0].mxu0 %v2353
    %v2514 = vpop.f32.mrb[0].mxu0
    %v2515 = vadd.f32 0.0, %v2514
    %v2516 = vpop.f32.mrb[0].mxu0
    %2517 = vmatprep.mubr.f32.mxu0 0.0
    %2518 = vmatmul.mubr.f32.gmra.mrb[0].mxu0 %v2356
    %v2519 = vpop.f32.mrb[0].mxu0
    %v2520 = vadd.f32 0.0, %v2519
    %v2521 = vpop.f32.mrb[0].mxu0
    %2522 = vmatprep.mubr.f32.mxu0 0.0
    %2523 = vmatmul.mubr.f32.gmra.mrb[0].mxu0 %v2359
    %v2524 = vpop.f32.mrb[0].mxu0
    %v2525 = vadd.f32 0.0, %v2524
    %v2526 = vpop.f32.mrb[0].mxu0
    %2527 = vmatprep.mubr.f32.mxu0 0.0
    %2528 = vmatmul.mubr.f32.gmra.mrb[0].mxu0 %v2362
    %v2529 = vpop.f32.mrb[0].mxu0
    %v2530 = vadd.f32 0.0, %v2529
    %v2531 = vpop.f32.mrb[0].mxu0
    %2532 = vmatprep.mubr.f32.mxu0 0.0
    %2533 = vmatmul.mubr.f32.gmra.mrb[0].mxu0 %v2365
    %v2534 = vpop.f32.mrb[0].mxu0
    %v2535 = vadd.f32 0.0, %v2534
    %v2536 = vpop.f32.mrb[0].mxu0
    %2537 = vmatprep.mubr.f32.mxu0 0.0
    %2538 = vmatmul.mubr.f32.gmra.mrb[0].mxu0 %v2368
    %v2539 = vpop.f32.mrb[0].mxu0
    %v2540 = vadd.f32 0.0, %v2539
    %v2541 = vpop.f32.mrb[0].mxu0
    %2542 = vmatprep.mubr.f32.mxu0 0.0
    %2543 = vmatmul.mubr.f32.gmra.mrb[0].mxu0 %v2371
    %v2544 = vpop.f32.mrb[0].mxu0
    %v2545 = vadd.f32 0.0, %v2544
    %v2546 = vpop.f32.mrb[0].mxu0
    %2547 = vmatprep.mubr.f32.mxu0 0.0
    %2548 = vmatmul.mubr.f32.gmra.mrb[0].mxu0 %v2374
    %v2549 = vpop.f32.mrb[0].mxu0
    %v2550 = vadd.f32 0.0, %v2549
    %v2551 = vpop.f32.mrb[0].mxu0
    %2552 = vmatprep.mubr.f32.mxu0 0.0
    %2553 = vmatmul.mubr.f32.gmra.mrb[0].mxu0 %v2377
    %v2554 = vpop.f32.mrb[0].mxu0
    %v2555 = vadd.f32 0.0, %v2554
    %v2556 = vpop.f32.mrb[0].mxu0
    %2557 = vmatprep.mubr.f32.mxu0 0.0
    %2558 = vmatmul.mubr.f32.gmra.mrb[0].mxu0 %v2380
    %v2559 = vpop.f32.mrb[0].mxu0
    %v2560 = vadd.f32 0.0, %v2559
    %v2561 = vpop.f32.mrb[0].mxu0
    %2562 = vmatprep.mubr.f32.mxu0 0.0
    %2563 = vmatmul.mubr.f32.gmra.mrb[0].mxu0 %v2383
    %v2564 = vpop.f32.mrb[0].mxu0
    %v2565 = vadd.f32 0.0, %v2564
    %v2566 = vpop.f32.mrb[0].mxu0
    %2567 = vmatprep.mubr.f32.mxu0 0.0
    %2568 = vmatmul.mubr.f32.gmra.mrb[0].mxu0 %v2386
    %v2569 = vpop.f32.mrb[0].mxu0
    %v2570 = vadd.f32 0.0, %v2569
    %v2571 = vpop.f32.mrb[0].mxu0
    %2572 = vmatprep.mubr.f32.mxu0 0.0
    %2573 = vmatmul.mubr.f32.gmra.mrb[0].mxu0 %v2389
    %v2574 = vpop.f32.mrb[0].mxu0
    %v2575 = vadd.f32 0.0, %v2574
    %v2576 = vpop.f32.mrb[0].mxu0
    %2577 = vmatprep.mubr.f32.mxu0 0.0
    %2578 = vmatmul.mubr.f32.gmra.mrb[0].mxu0 %v2392
    %v2579 = vpop.f32.mrb[0].mxu0
    %v2580 = vadd.f32 0.0, %v2579
    %v2581 = vpop.f32.mrb[0].mxu0
    %2582 = vmatprep.mubr.f32.mxu0 0.0
    %2583 = vmatmul.mubr.f32.gmra.mrb[0].mxu0 %v2395
    %v2584 = vpop.f32.mrb[0].mxu0
    %v2585 = vadd.f32 0.0, %v2584
    %v2586 = vpop.f32.mrb[0].mxu0
    %2587 = vmatprep.mubr.f32.mxu0 0.0
    %2588 = vmatmul.mubr.f32.gmra.mrb[0].mxu0 %v2398
    %v2589 = vpop.f32.mrb[0].mxu0
    %v2590 = vadd.f32 0.0, %v2589
    %v2591 = vpop.f32.mrb[0].mxu0
    %2592 = vmatprep.mubr.f32.mxu0 0.0
    %2593 = vmatmul.mubr.f32.gmra.mrb[0].mxu0 %v2401
    %v2594 = vpop.f32.mrb[0].mxu0
    %v2595 = vadd.f32 0.0, %v2594
    %v2596 = vpop.f32.mrb[0].mxu0
    %2597 = vmatprep.mubr.f32.mxu0 0.0
    %2598 = vmatmul.mubr.f32.gmra.mrb[0].mxu0 %v2404
    %v2599 = vpop.f32.mrb[0].mxu0
    %v2600 = vadd.f32 0.0, %v2599
    %v2601 = vpop.f32.mrb[0].mxu0
    %2602 = vmatprep.mubr.f32.mxu0 0.0
    %2603 = vmatmul.mubr.f32.gmra.mrb[0].mxu0 %v2407
    %v2604 = vpop.f32.mrb[0].mxu0
    %v2605 = vadd.f32 0.0, %v2604
    %v2606 = vpop.f32.mrb[0].mxu0
    %2607 = vmatprep.mubr.f32.mxu0 0.0
    %2608 = vmatmul.mubr.f32.gmra.mrb[0].mxu0 %v2410
    %v2609 = vpop.f32.mrb[0].mxu0
    %v2610 = vadd.f32 0.0, %v2609
    %v2611 = vpop.f32.mrb[0].mxu0
    %2612 = vmatprep.mubr.f32.mxu0 0.0
    %2613 = vmatmul.mubr.f32.gmra.mrb[0].mxu0 %v2413
    %v2614 = vpop.f32.mrb[0].mxu0
    %v2615 = vadd.f32 0.0, %v2614
    %v2616 = vpop.f32.mrb[0].mxu0
    %2617 = vmatprep.mubr.f32.mxu0 0.0
    %2618 = vmatmul.mubr.f32.gmra.mrb[0].mxu0 %v2416
    %v2619 = vpop.f32.mrb[0].mxu0
    %v2620 = vadd.f32 0.0, %v2619
    %v2621 = vpop.f32.mrb[0].mxu0
    %2622 = vmatprep.mubr.f32.mxu0 0.0
    %2623 = vmatmul.mubr.f32.gmra.mrb[0].mxu0 %v2419
    %v2624 = vpop.f32.mrb[0].mxu0
    %v2625 = vadd.f32 0.0, %v2624
    %v2626 = vpop.f32.mrb[0].mxu0
    %2627 = vmatprep.mubr.f32.mxu0 0.0
    %2628 = vmatmul.mubr.f32.gmra.mrb[0].mxu0 %v2422
    %v2629 = vpop.f32.mrb[0].mxu0
    %v2630 = vadd.f32 0.0, %v2629
    %v2631 = vpop.f32.mrb[0].mxu0
    %2632 = vmatprep.mubr.f32.mxu0 0.0
    %2633 = vmatmul.mubr.f32.gmra.mrb[0].mxu0 %v2425
    %v2634 = vpop.f32.mrb[0].mxu0
    %v2635 = vadd.f32 0.0, %v2634
    %v2636 = vpop.f32.mrb[0].mxu0
    %2637 = vmatprep.mubr.f32.mxu0 0.0
    %2638 = vmatmul.mubr.f32.gmra.mrb[0].mxu0 %v2428
    %v2639 = vpop.f32.mrb[0].mxu0
    %v2640 = vadd.f32 0.0, %v2639
    %v2641 = vpop.f32.mrb[0].mxu0
    %2642 = vmatprep.mubr.f32.mxu0 0.0
    %2643 = vmatmul.mubr.f32.gmra.mrb[0].mxu0 %v2431
    %v2644 = vpop.f32.mrb[0].mxu0
    %v2645 = vadd.f32 0.0, %v2644
    %v2646 = vpop.f32.mrb[0].mxu0
    %2647 = vmatprep.mubr.f32.mxu0 0.0
    %2648 = vmatmul.mubr.f32.gmra.mrb[0].mxu0 %v2434
    %v2649 = vpop.f32.mrb[0].mxu0
    %v2650 = vadd.f32 0.0, %v2649
    %v2651 = vpop.f32.mrb[0].mxu0
    %2652 = vmatprep.mubr.f32.mxu0 0.0
    %2653 = vmatmul.mubr.f32.gmra.mrb[0].mxu0 %v2437
    %v2654 = vpop.f32.mrb[0].mxu0
    %v2655 = vadd.f32 0.0, %v2654
    %v2656 = vpop.f32.mrb[0].mxu0
    %2657 = vmatprep.mubr.f32.mxu0 0.0
    %2658 = vmatmul.mubr.f32.gmra.mrb[0].mxu0 %v2440
    %v2659 = vpop.f32.mrb[0].mxu0
    %v2660 = vadd.f32 0.0, %v2659
    %v2661 = vpop.f32.mrb[0].mxu0
    %2662 = vmatprep.mubr.f32.mxu0 0.0
    %2663 = vmatmul.mubr.f32.gmra.mrb[0].mxu0 %v2443
    %v2664 = vpop.f32.mrb[0].mxu0
    %v2665 = vadd.f32 0.0, %v2664
    %v2666 = vpop.f32.mrb[0].mxu0
    %2667 = vmatprep.mubr.f32.mxu0 0.0
    %2668 = vmatmul.mubr.f32.gmra.mrb[0].mxu0 %v2446
    %v2669 = vpop.f32.mrb[0].mxu0
    %v2670 = vadd.f32 0.0, %v2669
    %v2671 = vpop.f32.mrb[0].mxu0
    %2672 = vdwg.mxu0
    %v2673 = vsel %vm1165, %v2240, 0.0
    %2674 = vadd.xlane.f32.xlu0 %v2673
    %v2675 = vpop.xlane.xlu0 %2674
    %v2676 = vsel %vm1165, %v2241, 0.0
    %2677 = vadd.xlane.f32.xlu0 %v2676
    %v2678 = vpop.xlane.xlu0 %2677
    %v2679 = vsel %vm1165, %v2242, 0.0
    %2680 = vadd.xlane.f32.xlu0 %v2679
    %v2681 = vpop.xlane.xlu0 %2680
    %v2682 = vsel %vm1165, %v2243, 0.0
    %2683 = vadd.xlane.f32.xlu0 %v2682
    %v2684 = vpop.xlane.xlu0 %2683
    %v2685 = vsel %vm1165, %v2244, 0.0
    %2686 = vadd.xlane.f32.xlu0 %v2685
    %v2687 = vpop.xlane.xlu0 %2686
    %v2688 = vsel %vm1165, %v2245, 0.0
    %2689 = vadd.xlane.f32.xlu0 %v2688
    %v2690 = vpop.xlane.xlu0 %2689
    %v2691 = vsel %vm1165, %v2246, 0.0
    %2692 = vadd.xlane.f32.xlu0 %v2691
    %v2693 = vpop.xlane.xlu0 %2692
    %v2694 = vsel %vm1165, %v2247, 0.0
    %2695 = vadd.xlane.f32.xlu0 %v2694
    %v2696 = vpop.xlane.xlu0 %2695
    %v2697 = vsel %vm1165, %v2248, 0.0
    %2698 = vadd.xlane.f32.xlu0 %v2697
    %v2699 = vpop.xlane.xlu0 %2698
    %v2700 = vsel %vm1165, %v2249, 0.0
    %2701 = vadd.xlane.f32.xlu0 %v2700
    %v2702 = vpop.xlane.xlu0 %2701
    %v2703 = vsel %vm1165, %v2250, 0.0
    %2704 = vadd.xlane.f32.xlu0 %v2703
    %v2705 = vpop.xlane.xlu0 %2704
    %v2706 = vsel %vm1165, %v2251, 0.0
    %2707 = vadd.xlane.f32.xlu0 %v2706
    %v2708 = vpop.xlane.xlu0 %2707
    %v2709 = vsel %vm1165, %v2252, 0.0
    %2710 = vadd.xlane.f32.xlu0 %v2709
    %v2711 = vpop.xlane.xlu0 %2710
    %v2712 = vsel %vm1165, %v2253, 0.0
    %2713 = vadd.xlane.f32.xlu0 %v2712
    %v2714 = vpop.xlane.xlu0 %2713
    %v2715 = vsel %vm1165, %v2254, 0.0
    %2716 = vadd.xlane.f32.xlu0 %v2715
    %v2717 = vpop.xlane.xlu0 %2716
    %v2718 = vsel %vm1165, %v2255, 0.0
    %2719 = vadd.xlane.f32.xlu0 %v2718
    %v2720 = vpop.xlane.xlu0 %2719
    %v2721 = vsel %vm1165, %v2256, 0.0
    %2722 = vadd.xlane.f32.xlu0 %v2721
    %v2723 = vpop.xlane.xlu0 %2722
    %v2724 = vsel %vm1165, %v2257, 0.0
    %2725 = vadd.xlane.f32.xlu0 %v2724
    %v2726 = vpop.xlane.xlu0 %2725
    %v2727 = vsel %vm1165, %v2258, 0.0
    %2728 = vadd.xlane.f32.xlu0 %v2727
    %v2729 = vpop.xlane.xlu0 %2728
    %v2730 = vsel %vm1165, %v2259, 0.0
    %2731 = vadd.xlane.f32.xlu0 %v2730
    %v2732 = vpop.xlane.xlu0 %2731
    %v2733 = vsel %vm1165, %v2260, 0.0
    %2734 = vadd.xlane.f32.xlu0 %v2733
    %v2735 = vpop.xlane.xlu0 %2734
    %v2736 = vsel %vm1165, %v2261, 0.0
    %2737 = vadd.xlane.f32.xlu0 %v2736
    %v2738 = vpop.xlane.xlu0 %2737
    %v2739 = vsel %vm1165, %v2262, 0.0
    %2740 = vadd.xlane.f32.xlu0 %v2739
    %v2741 = vpop.xlane.xlu0 %2740
    %v2742 = vsel %vm1165, %v2263, 0.0
    %2743 = vadd.xlane.f32.xlu0 %v2742
    %v2744 = vpop.xlane.xlu0 %2743
    %v2745 = vsel %vm1165, %v2264, 0.0
    %2746 = vadd.xlane.f32.xlu0 %v2745
    %v2747 = vpop.xlane.xlu0 %2746
    %v2748 = vsel %vm1165, %v2265, 0.0
    %2749 = vadd.xlane.f32.xlu0 %v2748
    %v2750 = vpop.xlane.xlu0 %2749
    %v2751 = vsel %vm1165, %v2266, 0.0
    %2752 = vadd.xlane.f32.xlu0 %v2751
    %v2753 = vpop.xlane.xlu0 %2752
    %v2754 = vsel %vm1165, %v2267, 0.0
    %2755 = vadd.xlane.f32.xlu0 %v2754
    %v2756 = vpop.xlane.xlu0 %2755
    %v2757 = vsel %vm1165, %v2268, 0.0
    %2758 = vadd.xlane.f32.xlu0 %v2757
    %v2759 = vpop.xlane.xlu0 %2758
    %v2760 = vsel %vm1165, %v2269, 0.0
    %2761 = vadd.xlane.f32.xlu0 %v2760
    %v2762 = vpop.xlane.xlu0 %2761
    %v2763 = vsel %vm1165, %v2270, 0.0
    %2764 = vadd.xlane.f32.xlu0 %v2763
    %v2765 = vpop.xlane.xlu0 %2764
    %v2766 = vsel %vm1165, %v2271, 0.0
    %2767 = vadd.xlane.f32.xlu0 %v2766
    %v2768 = vpop.xlane.xlu0 %2767
    %vm2769 = vcmp.gt.f32.partialorder %v2675, 0.5
    %vm2770 = vcmp.gt.f32.partialorder %v2678, 0.5
    %vm2771 = vcmp.gt.f32.partialorder %v2681, 0.5
    %vm2772 = vcmp.gt.f32.partialorder %v2684, 0.5
    %vm2773 = vcmp.gt.f32.partialorder %v2687, 0.5
    %vm2774 = vcmp.gt.f32.partialorder %v2690, 0.5
    %vm2775 = vcmp.gt.f32.partialorder %v2693, 0.5
    %vm2776 = vcmp.gt.f32.partialorder %v2696, 0.5
    %vm2777 = vcmp.gt.f32.partialorder %v2699, 0.5
    %vm2778 = vcmp.gt.f32.partialorder %v2702, 0.5
    %vm2779 = vcmp.gt.f32.partialorder %v2705, 0.5
    %vm2780 = vcmp.gt.f32.partialorder %v2708, 0.5
    %vm2781 = vcmp.gt.f32.partialorder %v2711, 0.5
    %vm2782 = vcmp.gt.f32.partialorder %v2714, 0.5
    %vm2783 = vcmp.gt.f32.partialorder %v2717, 0.5
    %vm2784 = vcmp.gt.f32.partialorder %v2720, 0.5
    %vm2785 = vcmp.gt.f32.partialorder %v2723, 0.5
    %vm2786 = vcmp.gt.f32.partialorder %v2726, 0.5
    %vm2787 = vcmp.gt.f32.partialorder %v2729, 0.5
    %vm2788 = vcmp.gt.f32.partialorder %v2732, 0.5
    %vm2789 = vcmp.gt.f32.partialorder %v2735, 0.5
    %vm2790 = vcmp.gt.f32.partialorder %v2738, 0.5
    %vm2791 = vcmp.gt.f32.partialorder %v2741, 0.5
    %vm2792 = vcmp.gt.f32.partialorder %v2744, 0.5
    %vm2793 = vcmp.gt.f32.partialorder %v2747, 0.5
    %vm2794 = vcmp.gt.f32.partialorder %v2750, 0.5
    %vm2795 = vcmp.gt.f32.partialorder %v2753, 0.5
    %vm2796 = vcmp.gt.f32.partialorder %v2756, 0.5
    %vm2797 = vcmp.gt.f32.partialorder %v2759, 0.5
    %vm2798 = vcmp.gt.f32.partialorder %v2762, 0.5
    %vm2799 = vcmp.gt.f32.partialorder %v2765, 0.5
    %vm2800 = vcmp.gt.f32.partialorder %v2768, 0.5
    %v2801 = vsel %vm2769, 1, 0
    %v2802 = vsel %vm2770, 1, 0
    %v2803 = vsel %vm2771, 1, 0
    %v2804 = vsel %vm2772, 1, 0
    %v2805 = vsel %vm2773, 1, 0
    %v2806 = vsel %vm2774, 1, 0
    %v2807 = vsel %vm2775, 1, 0
    %v2808 = vsel %vm2776, 1, 0
    %v2809 = vsel %vm2777, 1, 0
    %v2810 = vsel %vm2778, 1, 0
    %v2811 = vsel %vm2779, 1, 0
    %v2812 = vsel %vm2780, 1, 0
    %v2813 = vsel %vm2781, 1, 0
    %v2814 = vsel %vm2782, 1, 0
    %v2815 = vsel %vm2783, 1, 0
    %v2816 = vsel %vm2784, 1, 0
    %v2817 = vsel %vm2785, 1, 0
    %v2818 = vsel %vm2786, 1, 0
    %v2819 = vsel %vm2787, 1, 0
    %v2820 = vsel %vm2788, 1, 0
    %v2821 = vsel %vm2789, 1, 0
    %v2822 = vsel %vm2790, 1, 0
    %v2823 = vsel %vm2791, 1, 0
    %v2824 = vsel %vm2792, 1, 0
    %v2825 = vsel %vm2793, 1, 0
    %v2826 = vsel %vm2794, 1, 0
    %v2827 = vsel %vm2795, 1, 0
    %v2828 = vsel %vm2796, 1, 0
    %v2829 = vsel %vm2797, 1, 0
    %v2830 = vsel %vm2798, 1, 0
    %v2831 = vsel %vm2799, 1, 0
    %v2832 = vsel %vm2800, 1, 0
    %vm2833 = vcmp.eq.s32.totalorder %v2801, 1
    %vm2834 = vcmp.eq.s32.totalorder %v2802, 1
    %vm2835 = vcmp.eq.s32.totalorder %v2803, 1
    %vm2836 = vcmp.eq.s32.totalorder %v2804, 1
    %vm2837 = vcmp.eq.s32.totalorder %v2805, 1
    %vm2838 = vcmp.eq.s32.totalorder %v2806, 1
    %vm2839 = vcmp.eq.s32.totalorder %v2807, 1
    %vm2840 = vcmp.eq.s32.totalorder %v2808, 1
    %vm2841 = vcmp.eq.s32.totalorder %v2809, 1
    %vm2842 = vcmp.eq.s32.totalorder %v2810, 1
    %vm2843 = vcmp.eq.s32.totalorder %v2811, 1
    %vm2844 = vcmp.eq.s32.totalorder %v2812, 1
    %vm2845 = vcmp.eq.s32.totalorder %v2813, 1
    %vm2846 = vcmp.eq.s32.totalorder %v2814, 1
    %vm2847 = vcmp.eq.s32.totalorder %v2815, 1
    %vm2848 = vcmp.eq.s32.totalorder %v2816, 1
    %vm2849 = vcmp.eq.s32.totalorder %v2817, 1
    %vm2850 = vcmp.eq.s32.totalorder %v2818, 1
    %vm2851 = vcmp.eq.s32.totalorder %v2819, 1
    %vm2852 = vcmp.eq.s32.totalorder %v2820, 1
    %vm2853 = vcmp.eq.s32.totalorder %v2821, 1
    %vm2854 = vcmp.eq.s32.totalorder %v2822, 1
    %vm2855 = vcmp.eq.s32.totalorder %v2823, 1
    %vm2856 = vcmp.eq.s32.totalorder %v2824, 1
    %vm2857 = vcmp.eq.s32.totalorder %v2825, 1
    %vm2858 = vcmp.eq.s32.totalorder %v2826, 1
    %vm2859 = vcmp.eq.s32.totalorder %v2827, 1
    %vm2860 = vcmp.eq.s32.totalorder %v2828, 1
    %vm2861 = vcmp.eq.s32.totalorder %v2829, 1
    %vm2862 = vcmp.eq.s32.totalorder %v2830, 1
    %vm2863 = vcmp.eq.s32.totalorder %v2831, 1
    %vm2864 = vcmp.eq.s32.totalorder %v2832, 1
    %v2865 = vsel %vm2833, %v2515, %v248
    %v2866 = vsel %vm2834, %v2520, %v249
    %v2867 = vsel %vm2835, %v2525, %v250
    %v2868 = vsel %vm2836, %v2530, %v251
    %v2869 = vsel %vm2837, %v2535, %v252
    %v2870 = vsel %vm2838, %v2540, %v253
    %v2871 = vsel %vm2839, %v2545, %v254
    %v2872 = vsel %vm2840, %v2550, %v255
    %v2873 = vsel %vm2841, %v2555, %v256
    %v2874 = vsel %vm2842, %v2560, %v257
    %v2875 = vsel %vm2843, %v2565, %v258
    %v2876 = vsel %vm2844, %v2570, %v259
    %v2877 = vsel %vm2845, %v2575, %v260
    %v2878 = vsel %vm2846, %v2580, %v261
    %v2879 = vsel %vm2847, %v2585, %v262
    %v2880 = vsel %vm2848, %v2590, %v263
    %v2881 = vsel %vm2849, %v2595, %v264
    %v2882 = vsel %vm2850, %v2600, %v265
    %v2883 = vsel %vm2851, %v2605, %v266
    %v2884 = vsel %vm2852, %v2610, %v267
    %v2885 = vsel %vm2853, %v2615, %v268
    %v2886 = vsel %vm2854, %v2620, %v269
    %v2887 = vsel %vm2855, %v2625, %v270
    %v2888 = vsel %vm2856, %v2630, %v271
    %v2889 = vsel %vm2857, %v2635, %v272
    %v2890 = vsel %vm2858, %v2640, %v273
    %v2891 = vsel %vm2859, %v2645, %v274
    %v2892 = vsel %vm2860, %v2650, %v275
    %v2893 = vsel %vm2861, %v2655, %v276
    %v2894 = vsel %vm2862, %v2660, %v277
    %v2895 = vsel %vm2863, %v2665, %v278
    %v2896 = vsel %vm2864, %v2670, %v279
    %2897 = vst.msk [vmem:[%s10] sm:$0xff] %vm281, %v2865
    %2898 = vst.msk [vmem:[%s10 + $0x8] sm:$0xff] %vm281, %v2866
    %2899 = vst.msk [vmem:[%s10 + $0x10] sm:$0xff] %vm281, %v2867
    %2900 = vst.msk [vmem:[%s10 + $0x18] sm:$0xff] %vm281, %v2868
    %2901 = vst.msk [vmem:[%s10 + $0x20] sm:$0xff] %vm281, %v2869
    %2902 = vst.msk [vmem:[%s10 + $0x28] sm:$0xff] %vm281, %v2870
    %2903 = vst.msk [vmem:[%s10 + $0x30] sm:$0xff] %vm281, %v2871
    %2904 = vst.msk [vmem:[%s10 + $0x38] sm:$0xff] %vm281, %v2872
    %2905 = vst.msk [vmem:[%s10 + $0x40] sm:$0xff] %vm281, %v2873
    %2906 = vst.msk [vmem:[%s10 + $0x48] sm:$0xff] %vm281, %v2874
    %2907 = vst.msk [vmem:[%s10 + $0x50] sm:$0xff] %vm281, %v2875
    %2908 = vst.msk [vmem:[%s10 + $0x58] sm:$0xff] %vm281, %v2876
    %2909 = vst.msk [vmem:[%s10 + $0x60] sm:$0xff] %vm281, %v2877
    %2910 = vst.msk [vmem:[%s10 + $0x68] sm:$0xff] %vm281, %v2878
    %2911 = vst.msk [vmem:[%s10 + $0x70] sm:$0xff] %vm281, %v2879
    %2912 = vst.msk [vmem:[%s10 + $0x78] sm:$0xff] %vm281, %v2880
    %2913 = vst.msk [vmem:[%s10 + $0x80] sm:$0xff] %vm281, %v2881
    %2914 = vst.msk [vmem:[%s10 + $0x88] sm:$0xff] %vm281, %v2882
    %2915 = vst.msk [vmem:[%s10 + $0x90] sm:$0xff] %vm281, %v2883
    %2916 = vst.msk [vmem:[%s10 + $0x98] sm:$0xff] %vm281, %v2884
    %2917 = vst.msk [vmem:[%s10 + $0xa0] sm:$0xff] %vm281, %v2885
    %2918 = vst.msk [vmem:[%s10 + $0xa8] sm:$0xff] %vm281, %v2886
    %2919 = vst.msk [vmem:[%s10 + $0xb0] sm:$0xff] %vm281, %v2887
    %2920 = vst.msk [vmem:[%s10 + $0xb8] sm:$0xff] %vm281, %v2888
    %2921 = vst.msk [vmem:[%s10 + $0xc0] sm:$0xff] %vm281, %v2889
    %2922 = vst.msk [vmem:[%s10 + $0xc8] sm:$0xff] %vm281, %v2890
    %2923 = vst.msk [vmem:[%s10 + $0xd0] sm:$0xff] %vm281, %v2891
    %2924 = vst.msk [vmem:[%s10 + $0xd8] sm:$0xff] %vm281, %v2892
    %2925 = vst.msk [vmem:[%s10 + $0xe0] sm:$0xff] %vm281, %v2893
    %2926 = vst.msk [vmem:[%s10 + $0xe8] sm:$0xff] %vm281, %v2894
    %2927 = vst.msk [vmem:[%s10 + $0xf0] sm:$0xff] %vm281, %v2895
    %2928 = vst.msk [vmem:[%s10 + $0xf8] sm:$0xff] %vm281, %v2896
    // Predicated region
    $region34: #{sup_mcl_step.1} parent=1 // pred_check
      _
    $region35: #{sup_mcl_step.1} parent=1 // pred_check_branch
      %2930 = sbr.rel (0) target = $region37
    $region36: #{sup_mcl_step.1} parent=1 // pred_region
      %s2932 = ssub.s32 16, 16
      %2933 = vsyncadd [#allocation3], %s2932
      %s2935 = sshll.u32 [#allocation2], 4
      %s2936 = int_to_ptr.vmem [resolvable:$true] %s2935
      %2938 = dma.vmem_to_hbm [thread:$0]  %s2936, 16, %s8, [#allocation3]
    $region37: #{sup_mcl_step.1} parent=1 // pred_fallthru
      _
    // Predicated region
    $region38: #{sup_mcl_step.1} parent=1 // pred_check
      _
    $region39: #{sup_mcl_step.1} parent=1 // pred_check_branch
      %2940 = sbr.rel (0) target = $region41
    $region40: #{sup_mcl_step.1} parent=1 // pred_region
      %s2942 = ssub.s32 64, 64
      %2943 = vsyncadd [#allocation5], %s2942
      %s2945 = sshll.u32 [#allocation4], 4
      %s2946 = int_to_ptr.vmem [resolvable:$true] %s2945
      %2948 = dma.vmem_to_hbm [thread:$0]  %s2946, 64, %s9, [#allocation5]
    $region41: #{sup_mcl_step.1} parent=1 // pred_fallthru
      _
    // Predicated region
    $region42: #{sup_mcl_step.1} parent=1 // pred_check
      _
    $region43: #{sup_mcl_step.1} parent=1 // pred_check_branch
      %2950 = sbr.rel (0) target = $region45
    $region44: #{sup_mcl_step.1} parent=1 // pred_region
      _
    $region45: #{sup_mcl_step.1} parent=1 // pred_fallthru
      _
    // Predicated region
    $region46: #{sup_mcl_step.1} parent=1 // pred_check
      _
    $region47: #{sup_mcl_step.1} parent=1 // pred_check_branch
      %2952 = sbr.rel (0) target = $region49
    $region48: #{sup_mcl_step.1} parent=1 // pred_region
      %2953 = dma.done [#allocation3], 16
    $region49: #{sup_mcl_step.1} parent=1 // pred_fallthru
      _
    // Predicated region
    $region50: #{sup_mcl_step.1} parent=1 // pred_check
      _
    $region51: #{sup_mcl_step.1} parent=1 // pred_check_branch
      %2955 = sbr.rel (0) target = $region53
    $region52: #{sup_mcl_step.1} parent=1 // pred_region
      %2956 = dma.done [#allocation5], 64
    $region53: #{sup_mcl_step.1} parent=1 // pred_fallthru
      _
    // Predicated region
    $region54: #{sup_mcl_step.1} parent=1 // pred_check
      _
    $region55: #{sup_mcl_step.1} parent=1 // pred_check_branch
      %2958 = sbr.rel (0) target = $region57
    $region56: #{sup_mcl_step.1} parent=1 // pred_region
      _
    $region57: #{sup_mcl_step.1} parent=1 // pred_fallthru
      _
    %2959 = vsyncpa [#allocation3], 1
    %2960 = vsyncpa [#allocation5], 1

</llo_original>
